<compile_context>
chip_gen: v7x
topology: tpu7x:2x2x1
jax: 0.10.0
libtpu: 0.0.40
codegen_flags: <defaults>
</compile_context>

<pallas_src>
import functools

import jax
import jax.numpy as jnp
from jax import lax
from jax.experimental import pallas as pl
from jax.experimental.pallas import tpu as pltpu

EPS = 1e-5   # nn.BatchNorm2d default eps
PAD = 128    # per-row halo (lane-aligned); must be >= W + 1


def fused_block_kernel(x_ref, masks_ref, fold_ref,
                       w1_ref, b1_ref, g1_ref, be1_ref,
                       w2_ref, b2_ref, g2_ref, be2_ref,
                       o_ref, pad_ref, *, N, C, H, W):
    """Fused: conv1 -> bn1 -> relu -> conv2 -> bn2 -> +identity -> relu.

    Working layout: (N*C, H*W) -- one image-channel per sublane row, flattened
    spatial position on the lane axis (fully dense at N=2, C=4, H*W=256).
    """
    f32 = jnp.float32
    NC = N * C
    P = H * W
    inv_cnt = 1.0 / (N * P)          # per-channel element count over (N, H, W)

    mask_l = masks_ref[0:1, :]       # (1, P): 1.0 where w-1 is in-bounds
    mask_r = masks_ref[1:2, :]       # (1, P): 1.0 where w+1 is in-bounds
    fold = fold_ref[...]             # (NC, NC) = kron(ones(N,N), eye(C))

    # "Same" zero padding lives in a persistent VMEM scratch: zero it once,
    # each conv stage rewrites only the lane-aligned interior, halo stays 0.
    pad_ref[...] = jnp.zeros_like(pad_ref)

    def conv3x3(src, w_ref_, b_ref_):
        # src: (NC, P) activation.
        pad_ref[:, PAD:PAD + P] = src
        xp = pad_ref[...]                              # (NC, P + 2*PAD)
        acc = jnp.zeros((NC, P), f32)
        for dh in (-1, 0, 1):
            for dw in (-1, 0, 1):
                start = PAD + dh * W + dw
                tap = xp[:, start:start + P]           # shifted window, zeros
                if dw == -1:                           # in halo cover h-OOB
                    tap = tap * mask_l                 # w-OOB handled by mask
                elif dw == 1:
                    tap = tap * mask_r
                wk = w_ref_[(dh + 1) * 3 + (dw + 1)]   # (NC, NC) block-diag
                acc = acc + jnp.dot(wk, tap, preferred_element_type=f32)
        return acc + b_ref_[...]                       # conv bias, (NC, 1)

    def bn(y, g_ref_, be_ref_):
        # Training-mode BN (batch mean / biased variance over N,H,W), folded
        # into a single per-row scale+shift.  `fold` sums the per-(n,c)-row
        # partials across the N replicas of each channel and broadcasts the
        # channel totals back to all N*C rows.
        s = jnp.dot(fold, jnp.sum(y, axis=1, keepdims=True),
                    preferred_element_type=f32)
        ss = jnp.dot(fold, jnp.sum(y * y, axis=1, keepdims=True),
                     preferred_element_type=f32)
        mean = s * inv_cnt
        var = jnp.maximum(ss * inv_cnt - mean * mean, 0.0)  # clamp cancellation
        scale = g_ref_[...] * lax.rsqrt(var + EPS)
        shift = be_ref_[...] - mean * scale
        return y * scale + shift

    x = x_ref[...]                                     # (NC, P), f32
    y = jnp.maximum(bn(conv3x3(x, w1_ref, b1_ref), g1_ref, be1_ref), 0.0)
    y = bn(conv3x3(y, w2_ref, b2_ref), g2_ref, be2_ref) + x
    o_ref[...] = jnp.maximum(y, 0.0)                   # lane-dense store


def resnet_block_forward(x_nchw, params):
    """Pallas implementation of `block.forward` (projection_shortcut=None)."""
    w1, b1, g1, be1, w2, b2, g2, be2 = params
    N, C, H, W = x_nchw.shape
    P, NC = H * W, N * C
    assert PAD >= W + 1, "halo must cover a full row shift plus one column"

    f32 = jnp.float32
    # NCHW kept end-to-end: only contiguous reshapes, no transposes, and both
    # the input DMA and the output store are lane-dense (last dim H*W).
    x2d = x_nchw.astype(f32).reshape(NC, P)

    def prep_w(w):
        # PyTorch OIHW (Cout, Cin, 3, 3) -> per-tap block-diagonal weights
        # kron(I_N, W[:, :, kh, kw]) of shape (9, N*C, N*C), row/col order
        # matching the n-major, c-minor row packing of the activations.
        w_taps = jnp.transpose(w.astype(f32), (2, 3, 0, 1)).reshape(9, C, C)
        eye_n = jnp.eye(N, dtype=f32)
        return jnp.einsum('nm,koi->knomi', eye_n, w_taps).reshape(9, NC, NC)

    def prep_c(v):
        # Per-channel vector -> (N*C, 1), replicated for every n (n-major rows).
        return jnp.tile(v.astype(f32), (N,)).reshape(NC, 1)

    # Lane-position masks for the w-direction taps (dw = -1 / +1).
    w_pos = jnp.arange(P, dtype=jnp.int32) % W
    masks = jnp.stack([w_pos >= 1, w_pos <= W - 2]).astype(f32)       # (2, P)
    # Folds per-(n,c)-row BN partial sums into per-channel totals.
    fold = jnp.kron(jnp.ones((N, N), f32), jnp.eye(C, dtype=f32))     # (NC, NC)

    kernel = functools.partial(fused_block_kernel, N=N, C=C, H=H, W=W)
    vmem = pl.BlockSpec(memory_space=pltpu.MemorySpace.VMEM)

    y2d = pl.pallas_call(
        kernel,
        out_shape=jax.ShapeDtypeStruct((NC, P), f32),
        in_specs=[vmem] * 11,
        out_specs=vmem,
        scratch_shapes=[pltpu.VMEM((NC, P + 2 * PAD), f32)],
        # Total live data is well under 1 MiB; keep the scoped limit modest and
        # well below v7x's 64 MiB physical VMEM.
        compiler_params=pltpu.CompilerParams(vmem_limit_bytes=32 * 2 ** 20),
    )(x2d, masks, fold,
      prep_w(w1), prep_c(b1), prep_c(g1), prep_c(be1),
      prep_w(w2), prep_c(b2), prep_c(g2), prep_c(be2))

    return y2d.reshape(N, C, H, W)


def ref_forward(x_nchw, params):
    """Pure-JAX reference (NCHW / OIHW, train-mode BN) for verification."""
    w1, b1, g1, be1, w2, b2, g2, be2 = params

    def conv(t, w, b):
        y = lax.conv_general_dilated(
            t, w, window_strides=(1, 1), padding=((1, 1), (1, 1)),
            dimension_numbers=("NCHW", "OIHW", "NCHW"))
        return y + b.reshape(1, -1, 1, 1)

    def bn(t, g, b):
        m = jnp.mean(t, axis=(0, 2, 3), keepdims=True)
        v = jnp.mean((t - m) ** 2, axis=(0, 2, 3), keepdims=True)
        return (t - m) * lax.rsqrt(v + EPS) * g.reshape(1, -1, 1, 1) \
            + b.reshape(1, -1, 1, 1)

    x = x_nchw.astype(jnp.float32)
    y = jax.nn.relu(bn(conv(x, w1, b1), g1, be1))
    y = jax.nn.relu(bn(conv(y, w2, b2), g2, be2) + x)
    return y


if __name__ == "__main__":
    N, C, H, W = 2, 4, 16, 16
    key = jax.random.PRNGKey(0)
    ks = jax.random.split(key, 9)

    # Deterministic synthetic parameters; conv weights in PyTorch OIHW layout.
    w1 = 0.1 * jax.random.normal(ks[0], (C, C, 3, 3), jnp.float32)
    b1 = 0.1 * jax.random.normal(ks[1], (C,), jnp.float32)
    g1 = 1.0 + 0.1 * jax.random.normal(ks[2], (C,), jnp.float32)
    be1 = 0.1 * jax.random.normal(ks[3], (C,), jnp.float32)
    w2 = 0.1 * jax.random.normal(ks[4], (C, C, 3, 3), jnp.float32)
    b2 = 0.1 * jax.random.normal(ks[5], (C,), jnp.float32)
    g2 = 1.0 + 0.1 * jax.random.normal(ks[6], (C,), jnp.float32)
    be2 = 0.1 * jax.random.normal(ks[7], (C,), jnp.float32)
    params = (w1, b1, g1, be1, w2, b2, g2, be2)

    x = jax.random.normal(ks[8], (N, C, H, W), jnp.float32)

    out = jax.block_until_ready(resnet_block_forward(x, params))
    ref = jax.block_until_ready(ref_forward(x, params))

    assert out.shape == (N, C, H, W)
    err = float(jnp.max(jnp.abs(out - ref)))
    # Tolerance sized for TPU default-precision f32 matmul/conv paths (XLA may
    # use bf16 MXU passes on either side); genuine layout/indexing/weight-order
    # bugs produce O(1) errors, far above this bound.
    assert err < 2e-2, f"max abs error {err} vs JAX reference"
    print("KERNEL_OK")
</pallas_src>

<mosaic_0001>
module attributes {stable_mosaic.version = 11 : i64} {
  func.func @fused_block_kernel(%arg0: memref<8x256xf32, #tpu.memory_space<vmem>>, %arg1: memref<2x256xf32, #tpu.memory_space<vmem>>, %arg2: memref<8x8xf32, #tpu.memory_space<vmem>>, %arg3: memref<9x8x8xf32, #tpu.memory_space<vmem>>, %arg4: memref<8x1xf32, #tpu.memory_space<vmem>>, %arg5: memref<8x1xf32, #tpu.memory_space<vmem>>, %arg6: memref<8x1xf32, #tpu.memory_space<vmem>>, %arg7: memref<9x8x8xf32, #tpu.memory_space<vmem>>, %arg8: memref<8x1xf32, #tpu.memory_space<vmem>>, %arg9: memref<8x1xf32, #tpu.memory_space<vmem>>, %arg10: memref<8x1xf32, #tpu.memory_space<vmem>>, %arg11: memref<8x256xf32, #tpu.memory_space<vmem>>, %arg12: memref<8x512xf32, #tpu.memory_space<vmem>>) attributes {dimension_semantics = [], scalar_prefetch = 0 : i64, scratch_operands = 1 : i64, tpu.core_type = #tpu.core_type<tc>} {
    %c0 = arith.constant 0 : index
    %c0_0 = arith.constant 0 : index
    %0 = vector.load %arg1[%c0, %c0_0] : memref<2x256xf32, #tpu.memory_space<vmem>>, vector<1x256xf32>
    %c1 = arith.constant 1 : index
    %c0_1 = arith.constant 0 : index
    %1 = vector.load %arg1[%c1, %c0_1] : memref<2x256xf32, #tpu.memory_space<vmem>>, vector<1x256xf32>
    %c0_2 = arith.constant 0 : index
    %c0_3 = arith.constant 0 : index
    %2 = vector.load %arg2[%c0_2, %c0_3] : memref<8x8xf32, #tpu.memory_space<vmem>>, vector<8x8xf32>
    %cst = arith.constant 0.000000e+00 : f32
    %3 = vector.broadcast %cst : f32 to vector<8x512xf32>
    %c0_4 = arith.constant 0 : index
    %c0_5 = arith.constant 0 : index
    %4 = vector.load %arg12[%c0_4, %c0_5] : memref<8x512xf32, #tpu.memory_space<vmem>>, vector<8x512xf32>
    tpu.vector_store %arg12[%c0_4, %c0_5], %3 {strides = array<i32>} : memref<8x512xf32, #tpu.memory_space<vmem>>, vector<8x512xf32>,
    %c0_6 = arith.constant 0 : index
    %c0_7 = arith.constant 0 : index
    %5 = vector.load %arg0[%c0_6, %c0_7] : memref<8x256xf32, #tpu.memory_space<vmem>>, vector<8x256xf32>
    %c0_8 = arith.constant 0 : index
    %c128 = arith.constant 128 : index
    %6 = vector.load %arg12[%c0_8, %c128] : memref<8x512xf32, #tpu.memory_space<vmem>>, vector<8x256xf32>
    tpu.vector_store %arg12[%c0_8, %c128], %5 {strides = array<i32>} : memref<8x512xf32, #tpu.memory_space<vmem>>, vector<8x256xf32>,
    %c0_9 = arith.constant 0 : index
    %c0_10 = arith.constant 0 : index
    %7 = vector.load %arg12[%c0_9, %c0_10] : memref<8x512xf32, #tpu.memory_space<vmem>>, vector<8x512xf32>
    %cst_11 = arith.constant 0.000000e+00 : f32
    %8 = vector.broadcast %cst_11 : f32 to vector<8x256xf32>
    %9 = vector.extract_strided_slice %7 {offsets = [0, 111], sizes = [8, 256], strides = [1, 1]} : vector<8x512xf32> to vector<8x256xf32>
    %10 = vector.broadcast %0 : vector<1x256xf32> to vector<8x256xf32>
    %11 = arith.mulf %9, %10 : vector<8x256xf32>
    %c0_12 = arith.constant 0 : index
    %c0_13 = arith.constant 0 : index
    %c0_14 = arith.constant 0 : index
    %12 = vector.load %arg3[%c0_12, %c0_13, %c0_14] : memref<9x8x8xf32, #tpu.memory_space<vmem>>, vector<1x8x8xf32>
    %13 = vector.shape_cast %12 : vector<1x8x8xf32> to vector<8x8xf32>
    %cst_15 = arith.constant dense<0.000000e+00> : vector<8x256xf32>
    %14 = tpu.matmul %13, %11, %cst_15 {dimension_numbers = #tpu.dot_dimension_numbers<[1], [0], [0], [1], [0, 0, 1, 1], [], []>} : vector<8x8xf32>, vector<8x256xf32>, vector<8x256xf32> -> vector<8x256xf32>
    %15 = arith.addf %8, %14 : vector<8x256xf32>
    %16 = vector.extract_strided_slice %7 {offsets = [0, 112], sizes = [8, 256], strides = [1, 1]} : vector<8x512xf32> to vector<8x256xf32>
    %c1_16 = arith.constant 1 : index
    %c0_17 = arith.constant 0 : index
    %c0_18 = arith.constant 0 : index
    %17 = vector.load %arg3[%c1_16, %c0_17, %c0_18] : memref<9x8x8xf32, #tpu.memory_space<vmem>>, vector<1x8x8xf32>
    %18 = vector.shape_cast %17 : vector<1x8x8xf32> to vector<8x8xf32>
    %cst_19 = arith.constant dense<0.000000e+00> : vector<8x256xf32>
    %19 = tpu.matmul %18, %16, %cst_19 {dimension_numbers = #tpu.dot_dimension_numbers<[1], [0], [0], [1], [0, 0, 1, 1], [], []>} : vector<8x8xf32>, vector<8x256xf32>, vector<8x256xf32> -> vector<8x256xf32>
    %20 = arith.addf %15, %19 : vector<8x256xf32>
    %21 = vector.extract_strided_slice %7 {offsets = [0, 113], sizes = [8, 256], strides = [1, 1]} : vector<8x512xf32> to vector<8x256xf32>
    %22 = vector.broadcast %1 : vector<1x256xf32> to vector<8x256xf32>
    %23 = arith.mulf %21, %22 : vector<8x256xf32>
    %c2 = arith.constant 2 : index
    %c0_20 = arith.constant 0 : index
    %c0_21 = arith.constant 0 : index
    %24 = vector.load %arg3[%c2, %c0_20, %c0_21] : memref<9x8x8xf32, #tpu.memory_space<vmem>>, vector<1x8x8xf32>
    %25 = vector.shape_cast %24 : vector<1x8x8xf32> to vector<8x8xf32>
    %cst_22 = arith.constant dense<0.000000e+00> : vector<8x256xf32>
    %26 = tpu.matmul %25, %23, %cst_22 {dimension_numbers = #tpu.dot_dimension_numbers<[1], [0], [0], [1], [0, 0, 1, 1], [], []>} : vector<8x8xf32>, vector<8x256xf32>, vector<8x256xf32> -> vector<8x256xf32>
    %27 = arith.addf %20, %26 : vector<8x256xf32>
    %28 = vector.extract_strided_slice %7 {offsets = [0, 127], sizes = [8, 256], strides = [1, 1]} : vector<8x512xf32> to vector<8x256xf32>
    %29 = vector.broadcast %0 : vector<1x256xf32> to vector<8x256xf32>
    %30 = arith.mulf %28, %29 : vector<8x256xf32>
    %c3 = arith.constant 3 : index
    %c0_23 = arith.constant 0 : index
    %c0_24 = arith.constant 0 : index
    %31 = vector.load %arg3[%c3, %c0_23, %c0_24] : memref<9x8x8xf32, #tpu.memory_space<vmem>>, vector<1x8x8xf32>
    %32 = vector.shape_cast %31 : vector<1x8x8xf32> to vector<8x8xf32>
    %cst_25 = arith.constant dense<0.000000e+00> : vector<8x256xf32>
    %33 = tpu.matmul %32, %30, %cst_25 {dimension_numbers = #tpu.dot_dimension_numbers<[1], [0], [0], [1], [0, 0, 1, 1], [], []>} : vector<8x8xf32>, vector<8x256xf32>, vector<8x256xf32> -> vector<8x256xf32>
    %34 = arith.addf %27, %33 : vector<8x256xf32>
    %35 = vector.extract_strided_slice %7 {offsets = [0, 128], sizes = [8, 256], strides = [1, 1]} : vector<8x512xf32> to vector<8x256xf32>
    %c4 = arith.constant 4 : index
    %c0_26 = arith.constant 0 : index
    %c0_27 = arith.constant 0 : index
    %36 = vector.load %arg3[%c4, %c0_26, %c0_27] : memref<9x8x8xf32, #tpu.memory_space<vmem>>, vector<1x8x8xf32>
    %37 = vector.shape_cast %36 : vector<1x8x8xf32> to vector<8x8xf32>
    %cst_28 = arith.constant dense<0.000000e+00> : vector<8x256xf32>
    %38 = tpu.matmul %37, %35, %cst_28 {dimension_numbers = #tpu.dot_dimension_numbers<[1], [0], [0], [1], [0, 0, 1, 1], [], []>} : vector<8x8xf32>, vector<8x256xf32>, vector<8x256xf32> -> vector<8x256xf32>
    %39 = arith.addf %34, %38 : vector<8x256xf32>
    %40 = vector.extract_strided_slice %7 {offsets = [0, 129], sizes = [8, 256], strides = [1, 1]} : vector<8x512xf32> to vector<8x256xf32>
    %41 = vector.broadcast %1 : vector<1x256xf32> to vector<8x256xf32>
    %42 = arith.mulf %40, %41 : vector<8x256xf32>
    %c5 = arith.constant 5 : index
    %c0_29 = arith.constant 0 : index
    %c0_30 = arith.constant 0 : index
    %43 = vector.load %arg3[%c5, %c0_29, %c0_30] : memref<9x8x8xf32, #tpu.memory_space<vmem>>, vector<1x8x8xf32>
    %44 = vector.shape_cast %43 : vector<1x8x8xf32> to vector<8x8xf32>
    %cst_31 = arith.constant dense<0.000000e+00> : vector<8x256xf32>
    %45 = tpu.matmul %44, %42, %cst_31 {dimension_numbers = #tpu.dot_dimension_numbers<[1], [0], [0], [1], [0, 0, 1, 1], [], []>} : vector<8x8xf32>, vector<8x256xf32>, vector<8x256xf32> -> vector<8x256xf32>
    %46 = arith.addf %39, %45 : vector<8x256xf32>
    %47 = vector.extract_strided_slice %7 {offsets = [0, 143], sizes = [8, 256], strides = [1, 1]} : vector<8x512xf32> to vector<8x256xf32>
    %48 = vector.broadcast %0 : vector<1x256xf32> to vector<8x256xf32>
    %49 = arith.mulf %47, %48 : vector<8x256xf32>
    %c6 = arith.constant 6 : index
    %c0_32 = arith.constant 0 : index
    %c0_33 = arith.constant 0 : index
    %50 = vector.load %arg3[%c6, %c0_32, %c0_33] : memref<9x8x8xf32, #tpu.memory_space<vmem>>, vector<1x8x8xf32>
    %51 = vector.shape_cast %50 : vector<1x8x8xf32> to vector<8x8xf32>
    %cst_34 = arith.constant dense<0.000000e+00> : vector<8x256xf32>
    %52 = tpu.matmul %51, %49, %cst_34 {dimension_numbers = #tpu.dot_dimension_numbers<[1], [0], [0], [1], [0, 0, 1, 1], [], []>} : vector<8x8xf32>, vector<8x256xf32>, vector<8x256xf32> -> vector<8x256xf32>
    %53 = arith.addf %46, %52 : vector<8x256xf32>
    %54 = vector.extract_strided_slice %7 {offsets = [0, 144], sizes = [8, 256], strides = [1, 1]} : vector<8x512xf32> to vector<8x256xf32>
    %c7 = arith.constant 7 : index
    %c0_35 = arith.constant 0 : index
    %c0_36 = arith.constant 0 : index
    %55 = vector.load %arg3[%c7, %c0_35, %c0_36] : memref<9x8x8xf32, #tpu.memory_space<vmem>>, vector<1x8x8xf32>
    %56 = vector.shape_cast %55 : vector<1x8x8xf32> to vector<8x8xf32>
    %cst_37 = arith.constant dense<0.000000e+00> : vector<8x256xf32>
    %57 = tpu.matmul %56, %54, %cst_37 {dimension_numbers = #tpu.dot_dimension_numbers<[1], [0], [0], [1], [0, 0, 1, 1], [], []>} : vector<8x8xf32>, vector<8x256xf32>, vector<8x256xf32> -> vector<8x256xf32>
    %58 = arith.addf %53, %57 : vector<8x256xf32>
    %59 = vector.extract_strided_slice %7 {offsets = [0, 145], sizes = [8, 256], strides = [1, 1]} : vector<8x512xf32> to vector<8x256xf32>
    %60 = vector.broadcast %1 : vector<1x256xf32> to vector<8x256xf32>
    %61 = arith.mulf %59, %60 : vector<8x256xf32>
    %c8 = arith.constant 8 : index
    %c0_38 = arith.constant 0 : index
    %c0_39 = arith.constant 0 : index
    %62 = vector.load %arg3[%c8, %c0_38, %c0_39] : memref<9x8x8xf32, #tpu.memory_space<vmem>>, vector<1x8x8xf32>
    %63 = vector.shape_cast %62 : vector<1x8x8xf32> to vector<8x8xf32>
    %cst_40 = arith.constant dense<0.000000e+00> : vector<8x256xf32>
    %64 = tpu.matmul %63, %61, %cst_40 {dimension_numbers = #tpu.dot_dimension_numbers<[1], [0], [0], [1], [0, 0, 1, 1], [], []>} : vector<8x8xf32>, vector<8x256xf32>, vector<8x256xf32> -> vector<8x256xf32>
    %65 = arith.addf %58, %64 : vector<8x256xf32>
    %c0_41 = arith.constant 0 : index
    %c0_42 = arith.constant 0 : index
    %66 = vector.load %arg4[%c0_41, %c0_42] : memref<8x1xf32, #tpu.memory_space<vmem>>, vector<8x1xf32>
    %67 = vector.broadcast %66 : vector<8x1xf32> to vector<8x256xf32>
    %68 = arith.addf %65, %67 : vector<8x256xf32>
    %cst_43 = arith.constant dense<0.000000e+00> : vector<8xf32>
    %69 = vector.multi_reduction <add>, %68, %cst_43 [1] : vector<8x256xf32> to vector<8xf32>
    %70 = vector.shape_cast %69 : vector<8xf32> to vector<8x1xf32>
    %cst_44 = arith.constant dense<0.000000e+00> : vector<8x1xf32>
    %71 = tpu.matmul %2, %70, %cst_44 {dimension_numbers = #tpu.dot_dimension_numbers<[1], [0], [0], [1], [0, 0, 1, 1], [], []>} : vector<8x8xf32>, vector<8x1xf32>, vector<8x1xf32> -> vector<8x1xf32>
    %72 = arith.mulf %68, %68 : vector<8x256xf32>
    %cst_45 = arith.constant dense<0.000000e+00> : vector<8xf32>
    %73 = vector.multi_reduction <add>, %72, %cst_45 [1] : vector<8x256xf32> to vector<8xf32>
    %74 = vector.shape_cast %73 : vector<8xf32> to vector<8x1xf32>
    %cst_46 = arith.constant dense<0.000000e+00> : vector<8x1xf32>
    %75 = tpu.matmul %2, %74, %cst_46 {dimension_numbers = #tpu.dot_dimension_numbers<[1], [0], [0], [1], [0, 0, 1, 1], [], []>} : vector<8x8xf32>, vector<8x1xf32>, vector<8x1xf32> -> vector<8x1xf32>
    %cst_47 = arith.constant 0.001953125 : f32
    %76 = vector.broadcast %cst_47 : f32 to vector<8x1xf32>
    %77 = arith.mulf %71, %76 : vector<8x1xf32>
    %cst_48 = arith.constant 0.001953125 : f32
    %78 = vector.broadcast %cst_48 : f32 to vector<8x1xf32>
    %79 = arith.mulf %75, %78 : vector<8x1xf32>
    %80 = arith.mulf %77, %77 : vector<8x1xf32>
    %81 = arith.subf %79, %80 : vector<8x1xf32>
    %cst_49 = arith.constant 0.000000e+00 : f32
    %82 = vector.broadcast %cst_49 : f32 to vector<8x1xf32>
    %83 = arith.maximumf %81, %82 : vector<8x1xf32>
    %c0_50 = arith.constant 0 : index
    %c0_51 = arith.constant 0 : index
    %84 = vector.load %arg5[%c0_50, %c0_51] : memref<8x1xf32, #tpu.memory_space<vmem>>, vector<8x1xf32>
    %cst_52 = arith.constant 9.99999974E-6 : f32
    %85 = vector.broadcast %cst_52 : f32 to vector<8x1xf32>
    %86 = arith.addf %83, %85 : vector<8x1xf32>
    %87 = math.rsqrt %86 : vector<8x1xf32>
    %88 = arith.mulf %84, %87 : vector<8x1xf32>
    %c0_53 = arith.constant 0 : index
    %c0_54 = arith.constant 0 : index
    %89 = vector.load %arg6[%c0_53, %c0_54] : memref<8x1xf32, #tpu.memory_space<vmem>>, vector<8x1xf32>
    %90 = arith.mulf %77, %88 : vector<8x1xf32>
    %91 = arith.subf %89, %90 : vector<8x1xf32>
    %92 = vector.broadcast %88 : vector<8x1xf32> to vector<8x256xf32>
    %93 = arith.mulf %68, %92 : vector<8x256xf32>
    %94 = vector.broadcast %91 : vector<8x1xf32> to vector<8x256xf32>
    %95 = arith.addf %93, %94 : vector<8x256xf32>
    %cst_55 = arith.constant 0.000000e+00 : f32
    %96 = vector.broadcast %cst_55 : f32 to vector<8x256xf32>
    %97 = arith.maximumf %95, %96 : vector<8x256xf32>
    %c0_56 = arith.constant 0 : index
    %c128_57 = arith.constant 128 : index
    %98 = vector.load %arg12[%c0_56, %c128_57] : memref<8x512xf32, #tpu.memory_space<vmem>>, vector<8x256xf32>
    tpu.vector_store %arg12[%c0_56, %c128_57], %97 {strides = array<i32>} : memref<8x512xf32, #tpu.memory_space<vmem>>, vector<8x256xf32>,
    %c0_58 = arith.constant 0 : index
    %c0_59 = arith.constant 0 : index
    %99 = vector.load %arg12[%c0_58, %c0_59] : memref<8x512xf32, #tpu.memory_space<vmem>>, vector<8x512xf32>
    %cst_60 = arith.constant 0.000000e+00 : f32
    %100 = vector.broadcast %cst_60 : f32 to vector<8x256xf32>
    %101 = vector.extract_strided_slice %99 {offsets = [0, 111], sizes = [8, 256], strides = [1, 1]} : vector<8x512xf32> to vector<8x256xf32>
    %102 = vector.broadcast %0 : vector<1x256xf32> to vector<8x256xf32>
    %103 = arith.mulf %101, %102 : vector<8x256xf32>
    %c0_61 = arith.constant 0 : index
    %c0_62 = arith.constant 0 : index
    %c0_63 = arith.constant 0 : index
    %104 = vector.load %arg7[%c0_61, %c0_62, %c0_63] : memref<9x8x8xf32, #tpu.memory_space<vmem>>, vector<1x8x8xf32>
    %105 = vector.shape_cast %104 : vector<1x8x8xf32> to vector<8x8xf32>
    %cst_64 = arith.constant dense<0.000000e+00> : vector<8x256xf32>
    %106 = tpu.matmul %105, %103, %cst_64 {dimension_numbers = #tpu.dot_dimension_numbers<[1], [0], [0], [1], [0, 0, 1, 1], [], []>} : vector<8x8xf32>, vector<8x256xf32>, vector<8x256xf32> -> vector<8x256xf32>
    %107 = arith.addf %100, %106 : vector<8x256xf32>
    %108 = vector.extract_strided_slice %99 {offsets = [0, 112], sizes = [8, 256], strides = [1, 1]} : vector<8x512xf32> to vector<8x256xf32>
    %c1_65 = arith.constant 1 : index
    %c0_66 = arith.constant 0 : index
    %c0_67 = arith.constant 0 : index
    %109 = vector.load %arg7[%c1_65, %c0_66, %c0_67] : memref<9x8x8xf32, #tpu.memory_space<vmem>>, vector<1x8x8xf32>
    %110 = vector.shape_cast %109 : vector<1x8x8xf32> to vector<8x8xf32>
    %cst_68 = arith.constant dense<0.000000e+00> : vector<8x256xf32>
    %111 = tpu.matmul %110, %108, %cst_68 {dimension_numbers = #tpu.dot_dimension_numbers<[1], [0], [0], [1], [0, 0, 1, 1], [], []>} : vector<8x8xf32>, vector<8x256xf32>, vector<8x256xf32> -> vector<8x256xf32>
    %112 = arith.addf %107, %111 : vector<8x256xf32>
    %113 = vector.extract_strided_slice %99 {offsets = [0, 113], sizes = [8, 256], strides = [1, 1]} : vector<8x512xf32> to vector<8x256xf32>
    %114 = vector.broadcast %1 : vector<1x256xf32> to vector<8x256xf32>
    %115 = arith.mulf %113, %114 : vector<8x256xf32>
    %c2_69 = arith.constant 2 : index
    %c0_70 = arith.constant 0 : index
    %c0_71 = arith.constant 0 : index
    %116 = vector.load %arg7[%c2_69, %c0_70, %c0_71] : memref<9x8x8xf32, #tpu.memory_space<vmem>>, vector<1x8x8xf32>
    %117 = vector.shape_cast %116 : vector<1x8x8xf32> to vector<8x8xf32>
    %cst_72 = arith.constant dense<0.000000e+00> : vector<8x256xf32>
    %118 = tpu.matmul %117, %115, %cst_72 {dimension_numbers = #tpu.dot_dimension_numbers<[1], [0], [0], [1], [0, 0, 1, 1], [], []>} : vector<8x8xf32>, vector<8x256xf32>, vector<8x256xf32> -> vector<8x256xf32>
    %119 = arith.addf %112, %118 : vector<8x256xf32>
    %120 = vector.extract_strided_slice %99 {offsets = [0, 127], sizes = [8, 256], strides = [1, 1]} : vector<8x512xf32> to vector<8x256xf32>
    %121 = vector.broadcast %0 : vector<1x256xf32> to vector<8x256xf32>
    %122 = arith.mulf %120, %121 : vector<8x256xf32>
    %c3_73 = arith.constant 3 : index
    %c0_74 = arith.constant 0 : index
    %c0_75 = arith.constant 0 : index
    %123 = vector.load %arg7[%c3_73, %c0_74, %c0_75] : memref<9x8x8xf32, #tpu.memory_space<vmem>>, vector<1x8x8xf32>
    %124 = vector.shape_cast %123 : vector<1x8x8xf32> to vector<8x8xf32>
    %cst_76 = arith.constant dense<0.000000e+00> : vector<8x256xf32>
    %125 = tpu.matmul %124, %122, %cst_76 {dimension_numbers = #tpu.dot_dimension_numbers<[1], [0], [0], [1], [0, 0, 1, 1], [], []>} : vector<8x8xf32>, vector<8x256xf32>, vector<8x256xf32> -> vector<8x256xf32>
    %126 = arith.addf %119, %125 : vector<8x256xf32>
    %127 = vector.extract_strided_slice %99 {offsets = [0, 128], sizes = [8, 256], strides = [1, 1]} : vector<8x512xf32> to vector<8x256xf32>
    %c4_77 = arith.constant 4 : index
    %c0_78 = arith.constant 0 : index
    %c0_79 = arith.constant 0 : index
    %128 = vector.load %arg7[%c4_77, %c0_78, %c0_79] : memref<9x8x8xf32, #tpu.memory_space<vmem>>, vector<1x8x8xf32>
    %129 = vector.shape_cast %128 : vector<1x8x8xf32> to vector<8x8xf32>
    %cst_80 = arith.constant dense<0.000000e+00> : vector<8x256xf32>
    %130 = tpu.matmul %129, %127, %cst_80 {dimension_numbers = #tpu.dot_dimension_numbers<[1], [0], [0], [1], [0, 0, 1, 1], [], []>} : vector<8x8xf32>, vector<8x256xf32>, vector<8x256xf32> -> vector<8x256xf32>
    %131 = arith.addf %126, %130 : vector<8x256xf32>
    %132 = vector.extract_strided_slice %99 {offsets = [0, 129], sizes = [8, 256], strides = [1, 1]} : vector<8x512xf32> to vector<8x256xf32>
    %133 = vector.broadcast %1 : vector<1x256xf32> to vector<8x256xf32>
    %134 = arith.mulf %132, %133 : vector<8x256xf32>
    %c5_81 = arith.constant 5 : index
    %c0_82 = arith.constant 0 : index
    %c0_83 = arith.constant 0 : index
    %135 = vector.load %arg7[%c5_81, %c0_82, %c0_83] : memref<9x8x8xf32, #tpu.memory_space<vmem>>, vector<1x8x8xf32>
    %136 = vector.shape_cast %135 : vector<1x8x8xf32> to vector<8x8xf32>
    %cst_84 = arith.constant dense<0.000000e+00> : vector<8x256xf32>
    %137 = tpu.matmul %136, %134, %cst_84 {dimension_numbers = #tpu.dot_dimension_numbers<[1], [0], [0], [1], [0, 0, 1, 1], [], []>} : vector<8x8xf32>, vector<8x256xf32>, vector<8x256xf32> -> vector<8x256xf32>
    %138 = arith.addf %131, %137 : vector<8x256xf32>
    %139 = vector.extract_strided_slice %99 {offsets = [0, 143], sizes = [8, 256], strides = [1, 1]} : vector<8x512xf32> to vector<8x256xf32>
    %140 = vector.broadcast %0 : vector<1x256xf32> to vector<8x256xf32>
    %141 = arith.mulf %139, %140 : vector<8x256xf32>
    %c6_85 = arith.constant 6 : index
    %c0_86 = arith.constant 0 : index
    %c0_87 = arith.constant 0 : index
    %142 = vector.load %arg7[%c6_85, %c0_86, %c0_87] : memref<9x8x8xf32, #tpu.memory_space<vmem>>, vector<1x8x8xf32>
    %143 = vector.shape_cast %142 : vector<1x8x8xf32> to vector<8x8xf32>
    %cst_88 = arith.constant dense<0.000000e+00> : vector<8x256xf32>
    %144 = tpu.matmul %143, %141, %cst_88 {dimension_numbers = #tpu.dot_dimension_numbers<[1], [0], [0], [1], [0, 0, 1, 1], [], []>} : vector<8x8xf32>, vector<8x256xf32>, vector<8x256xf32> -> vector<8x256xf32>
    %145 = arith.addf %138, %144 : vector<8x256xf32>
    %146 = vector.extract_strided_slice %99 {offsets = [0, 144], sizes = [8, 256], strides = [1, 1]} : vector<8x512xf32> to vector<8x256xf32>
    %c7_89 = arith.constant 7 : index
    %c0_90 = arith.constant 0 : index
    %c0_91 = arith.constant 0 : index
    %147 = vector.load %arg7[%c7_89, %c0_90, %c0_91] : memref<9x8x8xf32, #tpu.memory_space<vmem>>, vector<1x8x8xf32>
    %148 = vector.shape_cast %147 : vector<1x8x8xf32> to vector<8x8xf32>
    %cst_92 = arith.constant dense<0.000000e+00> : vector<8x256xf32>
    %149 = tpu.matmul %148, %146, %cst_92 {dimension_numbers = #tpu.dot_dimension_numbers<[1], [0], [0], [1], [0, 0, 1, 1], [], []>} : vector<8x8xf32>, vector<8x256xf32>, vector<8x256xf32> -> vector<8x256xf32>
    %150 = arith.addf %145, %149 : vector<8x256xf32>
    %151 = vector.extract_strided_slice %99 {offsets = [0, 145], sizes = [8, 256], strides = [1, 1]} : vector<8x512xf32> to vector<8x256xf32>
    %152 = vector.broadcast %1 : vector<1x256xf32> to vector<8x256xf32>
    %153 = arith.mulf %151, %152 : vector<8x256xf32>
    %c8_93 = arith.constant 8 : index
    %c0_94 = arith.constant 0 : index
    %c0_95 = arith.constant 0 : index
    %154 = vector.load %arg7[%c8_93, %c0_94, %c0_95] : memref<9x8x8xf32, #tpu.memory_space<vmem>>, vector<1x8x8xf32>
    %155 = vector.shape_cast %154 : vector<1x8x8xf32> to vector<8x8xf32>
    %cst_96 = arith.constant dense<0.000000e+00> : vector<8x256xf32>
    %156 = tpu.matmul %155, %153, %cst_96 {dimension_numbers = #tpu.dot_dimension_numbers<[1], [0], [0], [1], [0, 0, 1, 1], [], []>} : vector<8x8xf32>, vector<8x256xf32>, vector<8x256xf32> -> vector<8x256xf32>
    %157 = arith.addf %150, %156 : vector<8x256xf32>
    %c0_97 = arith.constant 0 : index
    %c0_98 = arith.constant 0 : index
    %158 = vector.load %arg8[%c0_97, %c0_98] : memref<8x1xf32, #tpu.memory_space<vmem>>, vector<8x1xf32>
    %159 = vector.broadcast %158 : vector<8x1xf32> to vector<8x256xf32>
    %160 = arith.addf %157, %159 : vector<8x256xf32>
    %cst_99 = arith.constant dense<0.000000e+00> : vector<8xf32>
    %161 = vector.multi_reduction <add>, %160, %cst_99 [1] : vector<8x256xf32> to vector<8xf32>
    %162 = vector.shape_cast %161 : vector<8xf32> to vector<8x1xf32>
    %cst_100 = arith.constant dense<0.000000e+00> : vector<8x1xf32>
    %163 = tpu.matmul %2, %162, %cst_100 {dimension_numbers = #tpu.dot_dimension_numbers<[1], [0], [0], [1], [0, 0, 1, 1], [], []>} : vector<8x8xf32>, vector<8x1xf32>, vector<8x1xf32> -> vector<8x1xf32>
    %164 = arith.mulf %160, %160 : vector<8x256xf32>
    %cst_101 = arith.constant dense<0.000000e+00> : vector<8xf32>
    %165 = vector.multi_reduction <add>, %164, %cst_101 [1] : vector<8x256xf32> to vector<8xf32>
    %166 = vector.shape_cast %165 : vector<8xf32> to vector<8x1xf32>
    %cst_102 = arith.constant dense<0.000000e+00> : vector<8x1xf32>
    %167 = tpu.matmul %2, %166, %cst_102 {dimension_numbers = #tpu.dot_dimension_numbers<[1], [0], [0], [1], [0, 0, 1, 1], [], []>} : vector<8x8xf32>, vector<8x1xf32>, vector<8x1xf32> -> vector<8x1xf32>
    %cst_103 = arith.constant 0.001953125 : f32
    %168 = vector.broadcast %cst_103 : f32 to vector<8x1xf32>
    %169 = arith.mulf %163, %168 : vector<8x1xf32>
    %cst_104 = arith.constant 0.001953125 : f32
    %170 = vector.broadcast %cst_104 : f32 to vector<8x1xf32>
    %171 = arith.mulf %167, %170 : vector<8x1xf32>
    %172 = arith.mulf %169, %169 : vector<8x1xf32>
    %173 = arith.subf %171, %172 : vector<8x1xf32>
    %cst_105 = arith.constant 0.000000e+00 : f32
    %174 = vector.broadcast %cst_105 : f32 to vector<8x1xf32>
    %175 = arith.maximumf %173, %174 : vector<8x1xf32>
    %c0_106 = arith.constant 0 : index
    %c0_107 = arith.constant 0 : index
    %176 = vector.load %arg9[%c0_106, %c0_107] : memref<8x1xf32, #tpu.memory_space<vmem>>, vector<8x1xf32>
    %cst_108 = arith.constant 9.99999974E-6 : f32
    %177 = vector.broadcast %cst_108 : f32 to vector<8x1xf32>
    %178 = arith.addf %175, %177 : vector<8x1xf32>
    %179 = math.rsqrt %178 : vector<8x1xf32>
    %180 = arith.mulf %176, %179 : vector<8x1xf32>
    %c0_109 = arith.constant 0 : index
    %c0_110 = arith.constant 0 : index
    %181 = vector.load %arg10[%c0_109, %c0_110] : memref<8x1xf32, #tpu.memory_space<vmem>>, vector<8x1xf32>
    %182 = arith.mulf %169, %180 : vector<8x1xf32>
    %183 = arith.subf %181, %182 : vector<8x1xf32>
    %184 = vector.broadcast %180 : vector<8x1xf32> to vector<8x256xf32>
    %185 = arith.mulf %160, %184 : vector<8x256xf32>
    %186 = vector.broadcast %183 : vector<8x1xf32> to vector<8x256xf32>
    %187 = arith.addf %185, %186 : vector<8x256xf32>
    %188 = arith.addf %187, %5 : vector<8x256xf32>
    %cst_111 = arith.constant 0.000000e+00 : f32
    %189 = vector.broadcast %cst_111 : f32 to vector<8x256xf32>
    %190 = arith.maximumf %188, %189 : vector<8x256xf32>
    %c0_112 = arith.constant 0 : index
    %c0_113 = arith.constant 0 : index
    %191 = vector.load %arg11[%c0_112, %c0_113] : memref<8x256xf32, #tpu.memory_space<vmem>>, vector<8x256xf32>
    tpu.vector_store %arg11[%c0_112, %c0_113], %190 {strides = array<i32>} : memref<8x256xf32, #tpu.memory_space<vmem>>, vector<8x256xf32>,
    return
  }
}

</mosaic_0001>

<llo_original>
// kernel: tpu_custom_call.1
$region0: #{tpu_custom_call.1}
  #allocation0 [shape = 'u32[]', space=smem, size = 0x4, offset = 0x4, fixed_abs, tag = 'smem constant byte address 0x4 - core index']
  #allocation1 [shape = 'u32[144,128]{1,0:T(1,128)}', space=vmem, size = 0x12000, scoped, tag = 'internal scratch']
  #allocation2 [shape = 'f32[8,512]{1,0:T(8,128)}', space=vmem, size = 0x4000, scoped, tag = 'scratch operand']
  %s0 = inlined_call_operand.vmem [shape: f32[8,256], index: 0, kind: input, shape index: {}]
  %s1 = inlined_call_operand.vmem [shape: f32[2,256], index: 1, kind: input, shape index: {}]
  %s2 = inlined_call_operand.vmem [shape: f32[8,8], index: 2, kind: input, shape index: {}]
  %s3 = inlined_call_operand.vmem [shape: f32[9,8,8], index: 3, kind: input, shape index: {}]
  %s4 = inlined_call_operand.vmem [shape: f32[8,1], index: 4, kind: input, shape index: {}]
  %s5 = inlined_call_operand.vmem [shape: f32[8,1], index: 5, kind: input, shape index: {}]
  %s6 = inlined_call_operand.vmem [shape: f32[8,1], index: 6, kind: input, shape index: {}]
  %s7 = inlined_call_operand.vmem [shape: f32[9,8,8], index: 7, kind: input, shape index: {}]
  %s8 = inlined_call_operand.vmem [shape: f32[8,1], index: 8, kind: input, shape index: {}]
  %s9 = inlined_call_operand.vmem [shape: f32[8,1], index: 9, kind: input, shape index: {}]
  %s10 = inlined_call_operand.vmem [shape: f32[8,1], index: 10, kind: input, shape index: {}]
  %s11 = inlined_call_operand.hbm [shape: f32[8,256], index: 11, kind: output, shape index: {}]
  %s12 = sld [smem:[#allocation0]]
  $region54: #{tpu_custom_call.1} parent=0
    _
  %s14 = ssub.s32 1, %s12
  %s15 = scalar_select 0, %s14, %s12
  $region1: #{tpu_custom_call.1} parent=0
    #allocation3 [shape = 'u8[8192]{0}', space=vmem, size = 0x2000, scoped, tag = 'output window, operand 0, single buffered']
    #allocation4 [shape = 's32[1]{0}', space=sflag, size = 0x4, scoped, tag = 'scoped memory for tpu_custom_call.1']
    %16 = vsyncpa [#allocation4], 0
    // Predicated region
    $region2: #{tpu_custom_call.1} parent=1 // pred_check
      _
    $region3: #{tpu_custom_call.1} parent=1 // pred_check_branch
      %18 = sbr.rel (0) target = $region5
    $region4: #{tpu_custom_call.1} parent=1 // pred_region
      _
    $region5: #{tpu_custom_call.1} parent=1 // pred_fallthru
      _
    // Predicated region
    $region6: #{tpu_custom_call.1} parent=1 // pred_check
      _
    $region7: #{tpu_custom_call.1} parent=1 // pred_check_branch
      %20 = sbr.rel (0) target = $region9
    $region8: #{tpu_custom_call.1} parent=1 // pred_region
      _
    $region9: #{tpu_custom_call.1} parent=1 // pred_fallthru
      _
    // Predicated region
    $region10: #{tpu_custom_call.1} parent=1 // pred_check
      _
    $region11: #{tpu_custom_call.1} parent=1 // pred_check_branch
      %22 = sbr.rel (0) target = $region13
    $region12: #{tpu_custom_call.1} parent=1 // pred_region
      _
    $region13: #{tpu_custom_call.1} parent=1 // pred_fallthru
      _
    // Predicated region
    $region14: #{tpu_custom_call.1} parent=1 // pred_check
      _
    $region15: #{tpu_custom_call.1} parent=1 // pred_check_branch
      %24 = sbr.rel (0) target = $region17
    $region16: #{tpu_custom_call.1} parent=1 // pred_region
      _
    $region17: #{tpu_custom_call.1} parent=1 // pred_fallthru
      _
    // Predicated region
    $region18: #{tpu_custom_call.1} parent=1 // pred_check
      _
    $region19: #{tpu_custom_call.1} parent=1 // pred_check_branch
      %26 = sbr.rel (0) target = $region21
    $region20: #{tpu_custom_call.1} parent=1 // pred_region
      _
    $region21: #{tpu_custom_call.1} parent=1 // pred_fallthru
      _
    // Predicated region
    $region22: #{tpu_custom_call.1} parent=1 // pred_check
      _
    $region23: #{tpu_custom_call.1} parent=1 // pred_check_branch
      %28 = sbr.rel (0) target = $region25
    $region24: #{tpu_custom_call.1} parent=1 // pred_region
      _
    $region25: #{tpu_custom_call.1} parent=1 // pred_fallthru
      _
    // Predicated region
    $region26: #{tpu_custom_call.1} parent=1 // pred_check
      _
    $region27: #{tpu_custom_call.1} parent=1 // pred_check_branch
      %30 = sbr.rel (0) target = $region29
    $region28: #{tpu_custom_call.1} parent=1 // pred_region
      _
    $region29: #{tpu_custom_call.1} parent=1 // pred_fallthru
      _
    // Predicated region
    $region30: #{tpu_custom_call.1} parent=1 // pred_check
      _
    $region31: #{tpu_custom_call.1} parent=1 // pred_check_branch
      %32 = sbr.rel (0) target = $region33
    $region32: #{tpu_custom_call.1} parent=1 // pred_region
      _
    $region33: #{tpu_custom_call.1} parent=1 // pred_fallthru
      _
    // Predicated region
    $region34: #{tpu_custom_call.1} parent=1 // pred_check
      _
    $region35: #{tpu_custom_call.1} parent=1 // pred_check_branch
      %34 = sbr.rel (0) target = $region37
    $region36: #{tpu_custom_call.1} parent=1 // pred_region
      _
    $region37: #{tpu_custom_call.1} parent=1 // pred_fallthru
      _
    // Predicated region
    $region38: #{tpu_custom_call.1} parent=1 // pred_check
      _
    $region39: #{tpu_custom_call.1} parent=1 // pred_check_branch
      %36 = sbr.rel (0) target = $region41
    $region40: #{tpu_custom_call.1} parent=1 // pred_region
      _
    $region41: #{tpu_custom_call.1} parent=1 // pred_fallthru
      _
    // Predicated region
    $region42: #{tpu_custom_call.1} parent=1 // pred_check
      _
    $region43: #{tpu_custom_call.1} parent=1 // pred_check_branch
      %38 = sbr.rel (0) target = $region45
    $region44: #{tpu_custom_call.1} parent=1 // pred_region
      _
    $region45: #{tpu_custom_call.1} parent=1 // pred_fallthru
      _
    %v39 = vld [vmem:[%s1] ss:$2 sm:$0x3]
    %s40 = scalar_lea.vmem %s1, 1
    %v41 = vld [vmem:[%s40] ss:$2 sm:$0x3]
    %v42 = vld [vmem:[%s2] sm:$0xff]
    %43 = vst [vmem:[#allocation2] sm:$0xff] 0.0
    %44 = vst [vmem:[#allocation2 + $0x8] sm:$0xff] 0.0
    %45 = vst [vmem:[#allocation2 + $0x10] sm:$0xff] 0.0
    %46 = vst [vmem:[#allocation2 + $0x18] sm:$0xff] 0.0
    %v47 = vld [vmem:[%s0] sm:$0xff]
    %v48 = vld [vmem:[%s0 + $0x8] sm:$0xff]
    %49 = vst [vmem:[#allocation2 + $0x8] sm:$0xff] %v47
    %50 = vst [vmem:[#allocation2 + $0x10] sm:$0xff] %v48
    %v51 = vld [vmem:[#allocation2] sm:$0xff]
    %v52 = vld [vmem:[#allocation2 + $0x8] sm:$0xff]
    %v53 = vld [vmem:[#allocation2 + $0x10] sm:$0xff]
    %v54 = vld [vmem:[#allocation2 + $0x18] sm:$0xff]
    %v56 = vlaneseq
    %v57 = vshrl.u32 %v56, 7
    %v58 = vsub.s32 0, %v57
    %v59 = vrot.slane %v39, %v58
    %v60 = vlaneseq
    %v61 = vshrl.u32 %v60, 7
    %v62 = vsub.s32 1, %v61
    %v63 = vrot.slane %v39, %v62
    %64 = vrot.lane.b32.xlu0 %v59, 111
    %v65 = vpop.permute.xlu0 %64
    %66 = vrot.lane.b32.xlu0 %v63, 111
    %v67 = vpop.permute.xlu0 %66
    %vm68 = vcmask 908288
    %v69 = vsel %vm68, %v65, %v67
    %v73 = vmul.f32 %v51, %v65
    %v74 = vmul.f32 %v52, %v69
    %v75 = vmul.f32 %v53, %v67
    %v76 = vld [vmem:[%s3] sm:$0xff]
    %s77 = scalar_lea.vmem %s3, 8
    %v78 = vld [vmem:[%s77] sm:$0xff]
    %82 = vrot.lane.b32.xlu0 %v51, 16
    %v83 = vpop.permute.xlu0 %82
    %84 = vrot.lane.b32.xlu0 %v52, 16
    %v85 = vpop.permute.xlu0 %84
    %86 = vrot.lane.b32.xlu0 %v53, 16
    %v87 = vpop.permute.xlu0 %86
    %vm88 = vcmask 130048
    %v89 = vsel %vm88, %v83, %v85
    %v90 = vsel %vm88, %v85, %v87
    %vm93 = vcmask 64512
    %v95 = vsel %vm93, %v78, 0
    %97 = vmatprep.subr.mxu0 %v90
    %98 = vmatpush1.msra.mxu0 %v89
    %99 = vmatprep.subr.mxu0 0.0
    %100 = vmatpush1.msra.mxu0 0.0
    %101 = vmatprep.subr.mxu0 0.0
    %102 = vmatpush1.msra.mxu0 0.0
    %103 = vmatprep.subr.mxu0 0.0
    %104 = vmatpush1.msra.mxu0 0.0
    %105 = vmatprep.subr.mxu0 0.0
    %106 = vmatpush1.msra.mxu0 0.0
    %107 = vmatprep.subr.mxu0 0.0
    %108 = vmatpush1.msra.mxu0 0.0
    %109 = vmatprep.subr.mxu0 0.0
    %110 = vmatpush1.msra.mxu0 0.0
    %111 = vmatprep.subr.mxu0 0.0
    %112 = vmatpush1.msra.mxu0 0.0
    %113 = vmatprep.subr.mxu0 0.0
    %114 = vmatpush1.msra.mxu0 0.0
    %115 = vmatprep.subr.mxu0 0.0
    %116 = vmatpush1.msra.mxu0 0.0
    %117 = vmatprep.subr.mxu0 0.0
    %118 = vmatpush1.msra.mxu0 0.0
    %119 = vmatprep.subr.mxu0 0.0
    %120 = vmatpush1.msra.mxu0 0.0
    %121 = vmatprep.subr.mxu0 0.0
    %122 = vmatpush1.msra.mxu0 0.0
    %123 = vmatprep.subr.mxu0 0.0
    %124 = vmatpush1.msra.mxu0 0.0
    %125 = vmatprep.subr.mxu0 0.0
    %126 = vmatpush1.msra.mxu0 0.0
    %127 = vmatprep.subr.mxu0 0.0
    %128 = vmatpush1.msra.mxu0 0.0
    %129 = vmatprep.subr.mxu0 0.0
    %130 = vmatpush1.msra.mxu0 0.0
    %131 = vmatprep.subr.mxu0 0.0
    %132 = vmatpush1.msra.mxu0 0.0
    %133 = vmatprep.subr.mxu0 0.0
    %134 = vmatpush1.msra.mxu0 0.0
    %135 = vmatprep.subr.mxu0 0.0
    %136 = vmatpush1.msra.mxu0 0.0
    %137 = vmatprep.subr.mxu0 0.0
    %138 = vmatpush1.msra.mxu0 0.0
    %139 = vmatprep.subr.mxu0 0.0
    %140 = vmatpush1.msra.mxu0 0.0
    %141 = vmatprep.subr.mxu0 0.0
    %142 = vmatpush1.msra.mxu0 0.0
    %143 = vmatprep.subr.mxu0 0.0
    %144 = vmatpush1.msra.mxu0 0.0
    %145 = vmatprep.subr.mxu0 0.0
    %146 = vmatpush1.msra.mxu0 0.0
    %147 = vmatprep.subr.mxu0 0.0
    %148 = vmatpush1.msra.mxu0 0.0
    %149 = vmatprep.subr.mxu0 0.0
    %150 = vmatpush1.msra.mxu0 0.0
    %151 = vmatprep.subr.mxu0 0.0
    %152 = vmatpush1.msra.mxu0 0.0
    %153 = vmatprep.subr.mxu0 0.0
    %154 = vmatpush1.msra.mxu0 0.0
    %155 = vmatprep.subr.mxu0 0.0
    %156 = vmatpush1.msra.mxu0 0.0
    %157 = vmatprep.subr.mxu0 0.0
    %158 = vmatpush1.msra.mxu0 0.0
    %159 = vmatprep.subr.mxu0 0.0
    %160 = vmatpush1.msra.mxu0 0.0
    %161 = vmatprep.mubr.f32.mxu0 0.0
    %162 = vmatmul.mubr.f32.gmra.mrb[0].mxu0 %v95
    %v163 = vpop.f32.mrb[0].mxu0
    %v164 = vadd.f32 0.0, %v163
    %v165 = vpop.f32.mrb[0].mxu0
    %v166 = vadd.f32 0.0, %v165
    %167 = vdwg.mxu0
    %171 = vrot.lane.b32.xlu0 %v73, 17
    %v172 = vpop.permute.xlu0 %171
    %173 = vrot.lane.b32.xlu0 %v74, 17
    %v174 = vpop.permute.xlu0 %173
    %175 = vrot.lane.b32.xlu0 %v75, 17
    %v176 = vpop.permute.xlu0 %175
    %vm177 = vcmask 138240
    %v178 = vsel %vm177, %v172, %v174
    %v179 = vsel %vm177, %v174, %v176
    %v183 = vsel %vm93, %v76, 0
    %185 = vmatprep.subr.mxu0 %v179
    %186 = vmatpush1.msra.mxu0 %v178
    %187 = vmatprep.subr.mxu0 0.0
    %188 = vmatpush1.msra.mxu0 0.0
    %189 = vmatprep.subr.mxu0 0.0
    %190 = vmatpush1.msra.mxu0 0.0
    %191 = vmatprep.subr.mxu0 0.0
    %192 = vmatpush1.msra.mxu0 0.0
    %193 = vmatprep.subr.mxu0 0.0
    %194 = vmatpush1.msra.mxu0 0.0
    %195 = vmatprep.subr.mxu0 0.0
    %196 = vmatpush1.msra.mxu0 0.0
    %197 = vmatprep.subr.mxu0 0.0
    %198 = vmatpush1.msra.mxu0 0.0
    %199 = vmatprep.subr.mxu0 0.0
    %200 = vmatpush1.msra.mxu0 0.0
    %201 = vmatprep.subr.mxu0 0.0
    %202 = vmatpush1.msra.mxu0 0.0
    %203 = vmatprep.subr.mxu0 0.0
    %204 = vmatpush1.msra.mxu0 0.0
    %205 = vmatprep.subr.mxu0 0.0
    %206 = vmatpush1.msra.mxu0 0.0
    %207 = vmatprep.subr.mxu0 0.0
    %208 = vmatpush1.msra.mxu0 0.0
    %209 = vmatprep.subr.mxu0 0.0
    %210 = vmatpush1.msra.mxu0 0.0
    %211 = vmatprep.subr.mxu0 0.0
    %212 = vmatpush1.msra.mxu0 0.0
    %213 = vmatprep.subr.mxu0 0.0
    %214 = vmatpush1.msra.mxu0 0.0
    %215 = vmatprep.subr.mxu0 0.0
    %216 = vmatpush1.msra.mxu0 0.0
    %217 = vmatprep.subr.mxu0 0.0
    %218 = vmatpush1.msra.mxu0 0.0
    %219 = vmatprep.subr.mxu0 0.0
    %220 = vmatpush1.msra.mxu0 0.0
    %221 = vmatprep.subr.mxu0 0.0
    %222 = vmatpush1.msra.mxu0 0.0
    %223 = vmatprep.subr.mxu0 0.0
    %224 = vmatpush1.msra.mxu0 0.0
    %225 = vmatprep.subr.mxu0 0.0
    %226 = vmatpush1.msra.mxu0 0.0
    %227 = vmatprep.subr.mxu0 0.0
    %228 = vmatpush1.msra.mxu0 0.0
    %229 = vmatprep.subr.mxu0 0.0
    %230 = vmatpush1.msra.mxu0 0.0
    %231 = vmatprep.subr.mxu0 0.0
    %232 = vmatpush1.msra.mxu0 0.0
    %233 = vmatprep.subr.mxu0 0.0
    %234 = vmatpush1.msra.mxu0 0.0
    %235 = vmatprep.subr.mxu0 0.0
    %236 = vmatpush1.msra.mxu0 0.0
    %237 = vmatprep.subr.mxu0 0.0
    %238 = vmatpush1.msra.mxu0 0.0
    %239 = vmatprep.subr.mxu0 0.0
    %240 = vmatpush1.msra.mxu0 0.0
    %241 = vmatprep.subr.mxu0 0.0
    %242 = vmatpush1.msra.mxu0 0.0
    %243 = vmatprep.subr.mxu0 0.0
    %244 = vmatpush1.msra.mxu0 0.0
    %245 = vmatprep.subr.mxu0 0.0
    %246 = vmatpush1.msra.mxu0 0.0
    %247 = vmatprep.subr.mxu0 0.0
    %248 = vmatpush1.msra.mxu0 0.0
    %249 = vmatprep.mubr.f32.mxu0 0.0
    %250 = vmatmul.mubr.f32.gmra.mrb[0].mxu0 %v183
    %v251 = vpop.f32.mrb[0].mxu0
    %v252 = vadd.f32 %v164, %v251
    %v253 = vpop.f32.mrb[0].mxu0
    %v254 = vadd.f32 %v166, %v253
    %255 = vdwg.mxu0
    %v257 = vlaneseq
    %v258 = vshrl.u32 %v257, 7
    %v259 = vsub.s32 0, %v258
    %v260 = vrot.slane %v41, %v259
    %v261 = vlaneseq
    %v262 = vshrl.u32 %v261, 7
    %v263 = vsub.s32 1, %v262
    %v264 = vrot.slane %v41, %v263
    %265 = vrot.lane.b32.xlu0 %v260, 113
    %v266 = vpop.permute.xlu0 %265
    %267 = vrot.lane.b32.xlu0 %v264, 113
    %v268 = vpop.permute.xlu0 %267
    %vm269 = vcmask 924672
    %v270 = vsel %vm269, %v266, %v268
    %v274 = vmul.f32 %v51, %v266
    %v275 = vmul.f32 %v52, %v270
    %v276 = vmul.f32 %v53, %v268
    %s277 = scalar_lea.vmem %s3, 16
    %v278 = vld [vmem:[%s277] sm:$0xff]
    %282 = vrot.lane.b32.xlu0 %v274, 15
    %v283 = vpop.permute.xlu0 %282
    %284 = vrot.lane.b32.xlu0 %v275, 15
    %v285 = vpop.permute.xlu0 %284
    %286 = vrot.lane.b32.xlu0 %v276, 15
    %v287 = vpop.permute.xlu0 %286
    %vm288 = vcmask 121856
    %v289 = vsel %vm288, %v283, %v285
    %v290 = vsel %vm288, %v285, %v287
    %v294 = vsel %vm93, %v278, 0
    %296 = vmatprep.subr.mxu0 %v290
    %297 = vmatpush1.msra.mxu0 %v289
    %298 = vmatprep.subr.mxu0 0.0
    %299 = vmatpush1.msra.mxu0 0.0
    %300 = vmatprep.subr.mxu0 0.0
    %301 = vmatpush1.msra.mxu0 0.0
    %302 = vmatprep.subr.mxu0 0.0
    %303 = vmatpush1.msra.mxu0 0.0
    %304 = vmatprep.subr.mxu0 0.0
    %305 = vmatpush1.msra.mxu0 0.0
    %306 = vmatprep.subr.mxu0 0.0
    %307 = vmatpush1.msra.mxu0 0.0
    %308 = vmatprep.subr.mxu0 0.0
    %309 = vmatpush1.msra.mxu0 0.0
    %310 = vmatprep.subr.mxu0 0.0
    %311 = vmatpush1.msra.mxu0 0.0
    %312 = vmatprep.subr.mxu0 0.0
    %313 = vmatpush1.msra.mxu0 0.0
    %314 = vmatprep.subr.mxu0 0.0
    %315 = vmatpush1.msra.mxu0 0.0
    %316 = vmatprep.subr.mxu0 0.0
    %317 = vmatpush1.msra.mxu0 0.0
    %318 = vmatprep.subr.mxu0 0.0
    %319 = vmatpush1.msra.mxu0 0.0
    %320 = vmatprep.subr.mxu0 0.0
    %321 = vmatpush1.msra.mxu0 0.0
    %322 = vmatprep.subr.mxu0 0.0
    %323 = vmatpush1.msra.mxu0 0.0
    %324 = vmatprep.subr.mxu0 0.0
    %325 = vmatpush1.msra.mxu0 0.0
    %326 = vmatprep.subr.mxu0 0.0
    %327 = vmatpush1.msra.mxu0 0.0
    %328 = vmatprep.subr.mxu0 0.0
    %329 = vmatpush1.msra.mxu0 0.0
    %330 = vmatprep.subr.mxu0 0.0
    %331 = vmatpush1.msra.mxu0 0.0
    %332 = vmatprep.subr.mxu0 0.0
    %333 = vmatpush1.msra.mxu0 0.0
    %334 = vmatprep.subr.mxu0 0.0
    %335 = vmatpush1.msra.mxu0 0.0
    %336 = vmatprep.subr.mxu0 0.0
    %337 = vmatpush1.msra.mxu0 0.0
    %338 = vmatprep.subr.mxu0 0.0
    %339 = vmatpush1.msra.mxu0 0.0
    %340 = vmatprep.subr.mxu0 0.0
    %341 = vmatpush1.msra.mxu0 0.0
    %342 = vmatprep.subr.mxu0 0.0
    %343 = vmatpush1.msra.mxu0 0.0
    %344 = vmatprep.subr.mxu0 0.0
    %345 = vmatpush1.msra.mxu0 0.0
    %346 = vmatprep.subr.mxu0 0.0
    %347 = vmatpush1.msra.mxu0 0.0
    %348 = vmatprep.subr.mxu0 0.0
    %349 = vmatpush1.msra.mxu0 0.0
    %350 = vmatprep.subr.mxu0 0.0
    %351 = vmatpush1.msra.mxu0 0.0
    %352 = vmatprep.subr.mxu0 0.0
    %353 = vmatpush1.msra.mxu0 0.0
    %354 = vmatprep.subr.mxu0 0.0
    %355 = vmatpush1.msra.mxu0 0.0
    %356 = vmatprep.subr.mxu0 0.0
    %357 = vmatpush1.msra.mxu0 0.0
    %358 = vmatprep.subr.mxu0 0.0
    %359 = vmatpush1.msra.mxu0 0.0
    %360 = vmatprep.mubr.f32.mxu0 0.0
    %361 = vmatmul.mubr.f32.gmra.mrb[0].mxu0 %v294
    %v362 = vpop.f32.mrb[0].mxu0
    %v363 = vadd.f32 0.0, %v362
    %v364 = vpop.f32.mrb[0].mxu0
    %v365 = vadd.f32 0.0, %v364
    %366 = vdwg.mxu0
    %v367 = vadd.f32 %v252, %v363
    %v368 = vadd.f32 %v254, %v365
    %369 = vrot.lane.b32.xlu0 %v59, 127
    %v370 = vpop.permute.xlu0 %369
    %371 = vrot.lane.b32.xlu0 %v63, 127
    %v372 = vpop.permute.xlu0 %371
    %vm373 = vcmask 1039360
    %v374 = vsel %vm373, %v370, %v372
    %v378 = vmul.f32 %v51, %v370
    %v379 = vmul.f32 %v52, %v374
    %v380 = vmul.f32 %v53, %v372
    %s381 = scalar_lea.vmem %s3, 24
    %v382 = vld [vmem:[%s381] sm:$0xff]
    %386 = vrot.lane.b32.xlu0 %v378, 1
    %v387 = vpop.permute.xlu0 %386
    %388 = vrot.lane.b32.xlu0 %v379, 1
    %v389 = vpop.permute.xlu0 %388
    %390 = vrot.lane.b32.xlu0 %v380, 1
    %v391 = vpop.permute.xlu0 %390
    %vm392 = vcmask 7168
    %v393 = vsel %vm392, %v387, %v389
    %v394 = vsel %vm392, %v389, %v391
    %v398 = vsel %vm93, %v382, 0
    %400 = vmatprep.subr.mxu0 %v394
    %401 = vmatpush1.msra.mxu0 %v393
    %402 = vmatprep.subr.mxu0 0.0
    %403 = vmatpush1.msra.mxu0 0.0
    %404 = vmatprep.subr.mxu0 0.0
    %405 = vmatpush1.msra.mxu0 0.0
    %406 = vmatprep.subr.mxu0 0.0
    %407 = vmatpush1.msra.mxu0 0.0
    %408 = vmatprep.subr.mxu0 0.0
    %409 = vmatpush1.msra.mxu0 0.0
    %410 = vmatprep.subr.mxu0 0.0
    %411 = vmatpush1.msra.mxu0 0.0
    %412 = vmatprep.subr.mxu0 0.0
    %413 = vmatpush1.msra.mxu0 0.0
    %414 = vmatprep.subr.mxu0 0.0
    %415 = vmatpush1.msra.mxu0 0.0
    %416 = vmatprep.subr.mxu0 0.0
    %417 = vmatpush1.msra.mxu0 0.0
    %418 = vmatprep.subr.mxu0 0.0
    %419 = vmatpush1.msra.mxu0 0.0
    %420 = vmatprep.subr.mxu0 0.0
    %421 = vmatpush1.msra.mxu0 0.0
    %422 = vmatprep.subr.mxu0 0.0
    %423 = vmatpush1.msra.mxu0 0.0
    %424 = vmatprep.subr.mxu0 0.0
    %425 = vmatpush1.msra.mxu0 0.0
    %426 = vmatprep.subr.mxu0 0.0
    %427 = vmatpush1.msra.mxu0 0.0
    %428 = vmatprep.subr.mxu0 0.0
    %429 = vmatpush1.msra.mxu0 0.0
    %430 = vmatprep.subr.mxu0 0.0
    %431 = vmatpush1.msra.mxu0 0.0
    %432 = vmatprep.subr.mxu0 0.0
    %433 = vmatpush1.msra.mxu0 0.0
    %434 = vmatprep.subr.mxu0 0.0
    %435 = vmatpush1.msra.mxu0 0.0
    %436 = vmatprep.subr.mxu0 0.0
    %437 = vmatpush1.msra.mxu0 0.0
    %438 = vmatprep.subr.mxu0 0.0
    %439 = vmatpush1.msra.mxu0 0.0
    %440 = vmatprep.subr.mxu0 0.0
    %441 = vmatpush1.msra.mxu0 0.0
    %442 = vmatprep.subr.mxu0 0.0
    %443 = vmatpush1.msra.mxu0 0.0
    %444 = vmatprep.subr.mxu0 0.0
    %445 = vmatpush1.msra.mxu0 0.0
    %446 = vmatprep.subr.mxu0 0.0
    %447 = vmatpush1.msra.mxu0 0.0
    %448 = vmatprep.subr.mxu0 0.0
    %449 = vmatpush1.msra.mxu0 0.0
    %450 = vmatprep.subr.mxu0 0.0
    %451 = vmatpush1.msra.mxu0 0.0
    %452 = vmatprep.subr.mxu0 0.0
    %453 = vmatpush1.msra.mxu0 0.0
    %454 = vmatprep.subr.mxu0 0.0
    %455 = vmatpush1.msra.mxu0 0.0
    %456 = vmatprep.subr.mxu0 0.0
    %457 = vmatpush1.msra.mxu0 0.0
    %458 = vmatprep.subr.mxu0 0.0
    %459 = vmatpush1.msra.mxu0 0.0
    %460 = vmatprep.subr.mxu0 0.0
    %461 = vmatpush1.msra.mxu0 0.0
    %462 = vmatprep.subr.mxu0 0.0
    %463 = vmatpush1.msra.mxu0 0.0
    %464 = vmatprep.mubr.f32.mxu0 0.0
    %465 = vmatmul.mubr.f32.gmra.mrb[0].mxu0 %v398
    %v466 = vpop.f32.mrb[0].mxu0
    %v467 = vadd.f32 0.0, %v466
    %v468 = vpop.f32.mrb[0].mxu0
    %v469 = vadd.f32 0.0, %v468
    %470 = vdwg.mxu0
    %v471 = vadd.f32 %v367, %v467
    %v472 = vadd.f32 %v368, %v469
    %s473 = scalar_lea.vmem %s3, 32
    %v474 = vld [vmem:[%s473] sm:$0xff]
    %v476 = vsel %vm93, %v474, 0
    %478 = vmatprep.subr.mxu0 %v53
    %479 = vmatpush1.msra.mxu0 %v52
    %480 = vmatprep.subr.mxu0 0.0
    %481 = vmatpush1.msra.mxu0 0.0
    %482 = vmatprep.subr.mxu0 0.0
    %483 = vmatpush1.msra.mxu0 0.0
    %484 = vmatprep.subr.mxu0 0.0
    %485 = vmatpush1.msra.mxu0 0.0
    %486 = vmatprep.subr.mxu0 0.0
    %487 = vmatpush1.msra.mxu0 0.0
    %488 = vmatprep.subr.mxu0 0.0
    %489 = vmatpush1.msra.mxu0 0.0
    %490 = vmatprep.subr.mxu0 0.0
    %491 = vmatpush1.msra.mxu0 0.0
    %492 = vmatprep.subr.mxu0 0.0
    %493 = vmatpush1.msra.mxu0 0.0
    %494 = vmatprep.subr.mxu0 0.0
    %495 = vmatpush1.msra.mxu0 0.0
    %496 = vmatprep.subr.mxu0 0.0
    %497 = vmatpush1.msra.mxu0 0.0
    %498 = vmatprep.subr.mxu0 0.0
    %499 = vmatpush1.msra.mxu0 0.0
    %500 = vmatprep.subr.mxu0 0.0
    %501 = vmatpush1.msra.mxu0 0.0
    %502 = vmatprep.subr.mxu0 0.0
    %503 = vmatpush1.msra.mxu0 0.0
    %504 = vmatprep.subr.mxu0 0.0
    %505 = vmatpush1.msra.mxu0 0.0
    %506 = vmatprep.subr.mxu0 0.0
    %507 = vmatpush1.msra.mxu0 0.0
    %508 = vmatprep.subr.mxu0 0.0
    %509 = vmatpush1.msra.mxu0 0.0
    %510 = vmatprep.subr.mxu0 0.0
    %511 = vmatpush1.msra.mxu0 0.0
    %512 = vmatprep.subr.mxu0 0.0
    %513 = vmatpush1.msra.mxu0 0.0
    %514 = vmatprep.subr.mxu0 0.0
    %515 = vmatpush1.msra.mxu0 0.0
    %516 = vmatprep.subr.mxu0 0.0
    %517 = vmatpush1.msra.mxu0 0.0
    %518 = vmatprep.subr.mxu0 0.0
    %519 = vmatpush1.msra.mxu0 0.0
    %520 = vmatprep.subr.mxu0 0.0
    %521 = vmatpush1.msra.mxu0 0.0
    %522 = vmatprep.subr.mxu0 0.0
    %523 = vmatpush1.msra.mxu0 0.0
    %524 = vmatprep.subr.mxu0 0.0
    %525 = vmatpush1.msra.mxu0 0.0
    %526 = vmatprep.subr.mxu0 0.0
    %527 = vmatpush1.msra.mxu0 0.0
    %528 = vmatprep.subr.mxu0 0.0
    %529 = vmatpush1.msra.mxu0 0.0
    %530 = vmatprep.subr.mxu0 0.0
    %531 = vmatpush1.msra.mxu0 0.0
    %532 = vmatprep.subr.mxu0 0.0
    %533 = vmatpush1.msra.mxu0 0.0
    %534 = vmatprep.subr.mxu0 0.0
    %535 = vmatpush1.msra.mxu0 0.0
    %536 = vmatprep.subr.mxu0 0.0
    %537 = vmatpush1.msra.mxu0 0.0
    %538 = vmatprep.subr.mxu0 0.0
    %539 = vmatpush1.msra.mxu0 0.0
    %540 = vmatprep.subr.mxu0 0.0
    %541 = vmatpush1.msra.mxu0 0.0
    %542 = vmatprep.mubr.f32.mxu0 0.0
    %543 = vmatmul.mubr.f32.gmra.mrb[0].mxu0 %v476
    %v544 = vpop.f32.mrb[0].mxu0
    %v545 = vadd.f32 0.0, %v544
    %v546 = vpop.f32.mrb[0].mxu0
    %v547 = vadd.f32 0.0, %v546
    %548 = vdwg.mxu0
    %v549 = vadd.f32 %v471, %v545
    %v550 = vadd.f32 %v472, %v547
    %551 = vrot.lane.b32.xlu0 %v260, 1
    %v552 = vpop.permute.xlu0 %551
    %553 = vrot.lane.b32.xlu0 %v264, 1
    %v554 = vpop.permute.xlu0 %553
    %v555 = vsel %vm392, %v552, %v554
    %v559 = vmul.f32 %v52, %v552
    %v560 = vmul.f32 %v53, %v555
    %v561 = vmul.f32 %v54, %v554
    %s562 = scalar_lea.vmem %s3, 40
    %v563 = vld [vmem:[%s562] sm:$0xff]
    %567 = vrot.lane.b32.xlu0 %v559, 127
    %v568 = vpop.permute.xlu0 %567
    %569 = vrot.lane.b32.xlu0 %v560, 127
    %v570 = vpop.permute.xlu0 %569
    %571 = vrot.lane.b32.xlu0 %v561, 127
    %v572 = vpop.permute.xlu0 %571
    %v573 = vsel %vm373, %v568, %v570
    %v574 = vsel %vm373, %v570, %v572
    %v578 = vsel %vm93, %v563, 0
    %580 = vmatprep.subr.mxu0 %v574
    %581 = vmatpush1.msra.mxu0 %v573
    %582 = vmatprep.subr.mxu0 0.0
    %583 = vmatpush1.msra.mxu0 0.0
    %584 = vmatprep.subr.mxu0 0.0
    %585 = vmatpush1.msra.mxu0 0.0
    %586 = vmatprep.subr.mxu0 0.0
    %587 = vmatpush1.msra.mxu0 0.0
    %588 = vmatprep.subr.mxu0 0.0
    %589 = vmatpush1.msra.mxu0 0.0
    %590 = vmatprep.subr.mxu0 0.0
    %591 = vmatpush1.msra.mxu0 0.0
    %592 = vmatprep.subr.mxu0 0.0
    %593 = vmatpush1.msra.mxu0 0.0
    %594 = vmatprep.subr.mxu0 0.0
    %595 = vmatpush1.msra.mxu0 0.0
    %596 = vmatprep.subr.mxu0 0.0
    %597 = vmatpush1.msra.mxu0 0.0
    %598 = vmatprep.subr.mxu0 0.0
    %599 = vmatpush1.msra.mxu0 0.0
    %600 = vmatprep.subr.mxu0 0.0
    %601 = vmatpush1.msra.mxu0 0.0
    %602 = vmatprep.subr.mxu0 0.0
    %603 = vmatpush1.msra.mxu0 0.0
    %604 = vmatprep.subr.mxu0 0.0
    %605 = vmatpush1.msra.mxu0 0.0
    %606 = vmatprep.subr.mxu0 0.0
    %607 = vmatpush1.msra.mxu0 0.0
    %608 = vmatprep.subr.mxu0 0.0
    %609 = vmatpush1.msra.mxu0 0.0
    %610 = vmatprep.subr.mxu0 0.0
    %611 = vmatpush1.msra.mxu0 0.0
    %612 = vmatprep.subr.mxu0 0.0
    %613 = vmatpush1.msra.mxu0 0.0
    %614 = vmatprep.subr.mxu0 0.0
    %615 = vmatpush1.msra.mxu0 0.0
    %616 = vmatprep.subr.mxu0 0.0
    %617 = vmatpush1.msra.mxu0 0.0
    %618 = vmatprep.subr.mxu0 0.0
    %619 = vmatpush1.msra.mxu0 0.0
    %620 = vmatprep.subr.mxu0 0.0
    %621 = vmatpush1.msra.mxu0 0.0
    %622 = vmatprep.subr.mxu0 0.0
    %623 = vmatpush1.msra.mxu0 0.0
    %624 = vmatprep.subr.mxu0 0.0
    %625 = vmatpush1.msra.mxu0 0.0
    %626 = vmatprep.subr.mxu0 0.0
    %627 = vmatpush1.msra.mxu0 0.0
    %628 = vmatprep.subr.mxu0 0.0
    %629 = vmatpush1.msra.mxu0 0.0
    %630 = vmatprep.subr.mxu0 0.0
    %631 = vmatpush1.msra.mxu0 0.0
    %632 = vmatprep.subr.mxu0 0.0
    %633 = vmatpush1.msra.mxu0 0.0
    %634 = vmatprep.subr.mxu0 0.0
    %635 = vmatpush1.msra.mxu0 0.0
    %636 = vmatprep.subr.mxu0 0.0
    %637 = vmatpush1.msra.mxu0 0.0
    %638 = vmatprep.subr.mxu0 0.0
    %639 = vmatpush1.msra.mxu0 0.0
    %640 = vmatprep.subr.mxu0 0.0
    %641 = vmatpush1.msra.mxu0 0.0
    %642 = vmatprep.subr.mxu0 0.0
    %643 = vmatpush1.msra.mxu0 0.0
    %644 = vmatprep.mubr.f32.mxu0 0.0
    %645 = vmatmul.mubr.f32.gmra.mrb[0].mxu0 %v578
    %v646 = vpop.f32.mrb[0].mxu0
    %v647 = vadd.f32 0.0, %v646
    %v648 = vpop.f32.mrb[0].mxu0
    %v649 = vadd.f32 0.0, %v648
    %650 = vdwg.mxu0
    %v651 = vadd.f32 %v549, %v647
    %v652 = vadd.f32 %v550, %v649
    %653 = vrot.lane.b32.xlu0 %v59, 15
    %v654 = vpop.permute.xlu0 %653
    %655 = vrot.lane.b32.xlu0 %v63, 15
    %v656 = vpop.permute.xlu0 %655
    %v657 = vsel %vm288, %v654, %v656
    %v661 = vmul.f32 %v52, %v654
    %v662 = vmul.f32 %v53, %v657
    %v663 = vmul.f32 %v54, %v656
    %s664 = scalar_lea.vmem %s3, 48
    %v665 = vld [vmem:[%s664] sm:$0xff]
    %669 = vrot.lane.b32.xlu0 %v661, 113
    %v670 = vpop.permute.xlu0 %669
    %671 = vrot.lane.b32.xlu0 %v662, 113
    %v672 = vpop.permute.xlu0 %671
    %673 = vrot.lane.b32.xlu0 %v663, 113
    %v674 = vpop.permute.xlu0 %673
    %v675 = vsel %vm269, %v670, %v672
    %v676 = vsel %vm269, %v672, %v674
    %v680 = vsel %vm93, %v665, 0
    %682 = vmatprep.subr.mxu0 %v676
    %683 = vmatpush1.msra.mxu0 %v675
    %684 = vmatprep.subr.mxu0 0.0
    %685 = vmatpush1.msra.mxu0 0.0
    %686 = vmatprep.subr.mxu0 0.0
    %687 = vmatpush1.msra.mxu0 0.0
    %688 = vmatprep.subr.mxu0 0.0
    %689 = vmatpush1.msra.mxu0 0.0
    %690 = vmatprep.subr.mxu0 0.0
    %691 = vmatpush1.msra.mxu0 0.0
    %692 = vmatprep.subr.mxu0 0.0
    %693 = vmatpush1.msra.mxu0 0.0
    %694 = vmatprep.subr.mxu0 0.0
    %695 = vmatpush1.msra.mxu0 0.0
    %696 = vmatprep.subr.mxu0 0.0
    %697 = vmatpush1.msra.mxu0 0.0
    %698 = vmatprep.subr.mxu0 0.0
    %699 = vmatpush1.msra.mxu0 0.0
    %700 = vmatprep.subr.mxu0 0.0
    %701 = vmatpush1.msra.mxu0 0.0
    %702 = vmatprep.subr.mxu0 0.0
    %703 = vmatpush1.msra.mxu0 0.0
    %704 = vmatprep.subr.mxu0 0.0
    %705 = vmatpush1.msra.mxu0 0.0
    %706 = vmatprep.subr.mxu0 0.0
    %707 = vmatpush1.msra.mxu0 0.0
    %708 = vmatprep.subr.mxu0 0.0
    %709 = vmatpush1.msra.mxu0 0.0
    %710 = vmatprep.subr.mxu0 0.0
    %711 = vmatpush1.msra.mxu0 0.0
    %712 = vmatprep.subr.mxu0 0.0
    %713 = vmatpush1.msra.mxu0 0.0
    %714 = vmatprep.subr.mxu0 0.0
    %715 = vmatpush1.msra.mxu0 0.0
    %716 = vmatprep.subr.mxu0 0.0
    %717 = vmatpush1.msra.mxu0 0.0
    %718 = vmatprep.subr.mxu0 0.0
    %719 = vmatpush1.msra.mxu0 0.0
    %720 = vmatprep.subr.mxu0 0.0
    %721 = vmatpush1.msra.mxu0 0.0
    %722 = vmatprep.subr.mxu0 0.0
    %723 = vmatpush1.msra.mxu0 0.0
    %724 = vmatprep.subr.mxu0 0.0
    %725 = vmatpush1.msra.mxu0 0.0
    %726 = vmatprep.subr.mxu0 0.0
    %727 = vmatpush1.msra.mxu0 0.0
    %728 = vmatprep.subr.mxu0 0.0
    %729 = vmatpush1.msra.mxu0 0.0
    %730 = vmatprep.subr.mxu0 0.0
    %731 = vmatpush1.msra.mxu0 0.0
    %732 = vmatprep.subr.mxu0 0.0
    %733 = vmatpush1.msra.mxu0 0.0
    %734 = vmatprep.subr.mxu0 0.0
    %735 = vmatpush1.msra.mxu0 0.0
    %736 = vmatprep.subr.mxu0 0.0
    %737 = vmatpush1.msra.mxu0 0.0
    %738 = vmatprep.subr.mxu0 0.0
    %739 = vmatpush1.msra.mxu0 0.0
    %740 = vmatprep.subr.mxu0 0.0
    %741 = vmatpush1.msra.mxu0 0.0
    %742 = vmatprep.subr.mxu0 0.0
    %743 = vmatpush1.msra.mxu0 0.0
    %744 = vmatprep.subr.mxu0 0.0
    %745 = vmatpush1.msra.mxu0 0.0
    %746 = vmatprep.mubr.f32.mxu0 0.0
    %747 = vmatmul.mubr.f32.gmra.mrb[0].mxu0 %v680
    %v748 = vpop.f32.mrb[0].mxu0
    %v749 = vadd.f32 0.0, %v748
    %v750 = vpop.f32.mrb[0].mxu0
    %v751 = vadd.f32 0.0, %v750
    %752 = vdwg.mxu0
    %v753 = vadd.f32 %v651, %v749
    %v754 = vadd.f32 %v652, %v751
    %s755 = scalar_lea.vmem %s3, 56
    %v756 = vld [vmem:[%s755] sm:$0xff]
    %758 = vrot.lane.b32.xlu0 %v52, 112
    %v759 = vpop.permute.xlu0 %758
    %760 = vrot.lane.b32.xlu0 %v53, 112
    %v761 = vpop.permute.xlu0 %760
    %762 = vrot.lane.b32.xlu0 %v54, 112
    %v763 = vpop.permute.xlu0 %762
    %vm764 = vcmask 916480
    %v765 = vsel %vm764, %v759, %v761
    %v766 = vsel %vm764, %v761, %v763
    %v770 = vsel %vm93, %v756, 0
    %772 = vmatprep.subr.mxu0 %v766
    %773 = vmatpush1.msra.mxu0 %v765
    %774 = vmatprep.subr.mxu0 0.0
    %775 = vmatpush1.msra.mxu0 0.0
    %776 = vmatprep.subr.mxu0 0.0
    %777 = vmatpush1.msra.mxu0 0.0
    %778 = vmatprep.subr.mxu0 0.0
    %779 = vmatpush1.msra.mxu0 0.0
    %780 = vmatprep.subr.mxu0 0.0
    %781 = vmatpush1.msra.mxu0 0.0
    %782 = vmatprep.subr.mxu0 0.0
    %783 = vmatpush1.msra.mxu0 0.0
    %784 = vmatprep.subr.mxu0 0.0
    %785 = vmatpush1.msra.mxu0 0.0
    %786 = vmatprep.subr.mxu0 0.0
    %787 = vmatpush1.msra.mxu0 0.0
    %788 = vmatprep.subr.mxu0 0.0
    %789 = vmatpush1.msra.mxu0 0.0
    %790 = vmatprep.subr.mxu0 0.0
    %791 = vmatpush1.msra.mxu0 0.0
    %792 = vmatprep.subr.mxu0 0.0
    %793 = vmatpush1.msra.mxu0 0.0
    %794 = vmatprep.subr.mxu0 0.0
    %795 = vmatpush1.msra.mxu0 0.0
    %796 = vmatprep.subr.mxu0 0.0
    %797 = vmatpush1.msra.mxu0 0.0
    %798 = vmatprep.subr.mxu0 0.0
    %799 = vmatpush1.msra.mxu0 0.0
    %800 = vmatprep.subr.mxu0 0.0
    %801 = vmatpush1.msra.mxu0 0.0
    %802 = vmatprep.subr.mxu0 0.0
    %803 = vmatpush1.msra.mxu0 0.0
    %804 = vmatprep.subr.mxu0 0.0
    %805 = vmatpush1.msra.mxu0 0.0
    %806 = vmatprep.subr.mxu0 0.0
    %807 = vmatpush1.msra.mxu0 0.0
    %808 = vmatprep.subr.mxu0 0.0
    %809 = vmatpush1.msra.mxu0 0.0
    %810 = vmatprep.subr.mxu0 0.0
    %811 = vmatpush1.msra.mxu0 0.0
    %812 = vmatprep.subr.mxu0 0.0
    %813 = vmatpush1.msra.mxu0 0.0
    %814 = vmatprep.subr.mxu0 0.0
    %815 = vmatpush1.msra.mxu0 0.0
    %816 = vmatprep.subr.mxu0 0.0
    %817 = vmatpush1.msra.mxu0 0.0
    %818 = vmatprep.subr.mxu0 0.0
    %819 = vmatpush1.msra.mxu0 0.0
    %820 = vmatprep.subr.mxu0 0.0
    %821 = vmatpush1.msra.mxu0 0.0
    %822 = vmatprep.subr.mxu0 0.0
    %823 = vmatpush1.msra.mxu0 0.0
    %824 = vmatprep.subr.mxu0 0.0
    %825 = vmatpush1.msra.mxu0 0.0
    %826 = vmatprep.subr.mxu0 0.0
    %827 = vmatpush1.msra.mxu0 0.0
    %828 = vmatprep.subr.mxu0 0.0
    %829 = vmatpush1.msra.mxu0 0.0
    %830 = vmatprep.subr.mxu0 0.0
    %831 = vmatpush1.msra.mxu0 0.0
    %832 = vmatprep.subr.mxu0 0.0
    %833 = vmatpush1.msra.mxu0 0.0
    %834 = vmatprep.subr.mxu0 0.0
    %835 = vmatpush1.msra.mxu0 0.0
    %836 = vmatprep.mubr.f32.mxu0 0.0
    %837 = vmatmul.mubr.f32.gmra.mrb[0].mxu0 %v770
    %v838 = vpop.f32.mrb[0].mxu0
    %v839 = vadd.f32 0.0, %v838
    %v840 = vpop.f32.mrb[0].mxu0
    %v841 = vadd.f32 0.0, %v840
    %842 = vdwg.mxu0
    %v843 = vadd.f32 %v753, %v839
    %v844 = vadd.f32 %v754, %v841
    %845 = vrot.lane.b32.xlu0 %v260, 17
    %v846 = vpop.permute.xlu0 %845
    %847 = vrot.lane.b32.xlu0 %v264, 17
    %v848 = vpop.permute.xlu0 %847
    %v849 = vsel %vm177, %v846, %v848
    %v853 = vmul.f32 %v52, %v846
    %v854 = vmul.f32 %v53, %v849
    %v855 = vmul.f32 %v54, %v848
    %s856 = scalar_lea.vmem %s3, 64
    %v857 = vld [vmem:[%s856] sm:$0xff]
    %861 = vrot.lane.b32.xlu0 %v853, 111
    %v862 = vpop.permute.xlu0 %861
    %863 = vrot.lane.b32.xlu0 %v854, 111
    %v864 = vpop.permute.xlu0 %863
    %865 = vrot.lane.b32.xlu0 %v855, 111
    %v866 = vpop.permute.xlu0 %865
    %v867 = vsel %vm68, %v862, %v864
    %v868 = vsel %vm68, %v864, %v866
    %v872 = vsel %vm93, %v857, 0
    %874 = vmatprep.subr.mxu0 %v868
    %875 = vmatpush1.msra.mxu0 %v867
    %876 = vmatprep.subr.mxu0 0.0
    %877 = vmatpush1.msra.mxu0 0.0
    %878 = vmatprep.subr.mxu0 0.0
    %879 = vmatpush1.msra.mxu0 0.0
    %880 = vmatprep.subr.mxu0 0.0
    %881 = vmatpush1.msra.mxu0 0.0
    %882 = vmatprep.subr.mxu0 0.0
    %883 = vmatpush1.msra.mxu0 0.0
    %884 = vmatprep.subr.mxu0 0.0
    %885 = vmatpush1.msra.mxu0 0.0
    %886 = vmatprep.subr.mxu0 0.0
    %887 = vmatpush1.msra.mxu0 0.0
    %888 = vmatprep.subr.mxu0 0.0
    %889 = vmatpush1.msra.mxu0 0.0
    %890 = vmatprep.subr.mxu0 0.0
    %891 = vmatpush1.msra.mxu0 0.0
    %892 = vmatprep.subr.mxu0 0.0
    %893 = vmatpush1.msra.mxu0 0.0
    %894 = vmatprep.subr.mxu0 0.0
    %895 = vmatpush1.msra.mxu0 0.0
    %896 = vmatprep.subr.mxu0 0.0
    %897 = vmatpush1.msra.mxu0 0.0
    %898 = vmatprep.subr.mxu0 0.0
    %899 = vmatpush1.msra.mxu0 0.0
    %900 = vmatprep.subr.mxu0 0.0
    %901 = vmatpush1.msra.mxu0 0.0
    %902 = vmatprep.subr.mxu0 0.0
    %903 = vmatpush1.msra.mxu0 0.0
    %904 = vmatprep.subr.mxu0 0.0
    %905 = vmatpush1.msra.mxu0 0.0
    %906 = vmatprep.subr.mxu0 0.0
    %907 = vmatpush1.msra.mxu0 0.0
    %908 = vmatprep.subr.mxu0 0.0
    %909 = vmatpush1.msra.mxu0 0.0
    %910 = vmatprep.subr.mxu0 0.0
    %911 = vmatpush1.msra.mxu0 0.0
    %912 = vmatprep.subr.mxu0 0.0
    %913 = vmatpush1.msra.mxu0 0.0
    %914 = vmatprep.subr.mxu0 0.0
    %915 = vmatpush1.msra.mxu0 0.0
    %916 = vmatprep.subr.mxu0 0.0
    %917 = vmatpush1.msra.mxu0 0.0
    %918 = vmatprep.subr.mxu0 0.0
    %919 = vmatpush1.msra.mxu0 0.0
    %920 = vmatprep.subr.mxu0 0.0
    %921 = vmatpush1.msra.mxu0 0.0
    %922 = vmatprep.subr.mxu0 0.0
    %923 = vmatpush1.msra.mxu0 0.0
    %924 = vmatprep.subr.mxu0 0.0
    %925 = vmatpush1.msra.mxu0 0.0
    %926 = vmatprep.subr.mxu0 0.0
    %927 = vmatpush1.msra.mxu0 0.0
    %928 = vmatprep.subr.mxu0 0.0
    %929 = vmatpush1.msra.mxu0 0.0
    %930 = vmatprep.subr.mxu0 0.0
    %931 = vmatpush1.msra.mxu0 0.0
    %932 = vmatprep.subr.mxu0 0.0
    %933 = vmatpush1.msra.mxu0 0.0
    %934 = vmatprep.subr.mxu0 0.0
    %935 = vmatpush1.msra.mxu0 0.0
    %936 = vmatprep.subr.mxu0 0.0
    %937 = vmatpush1.msra.mxu0 0.0
    %938 = vmatprep.mubr.f32.mxu0 0.0
    %939 = vmatmul.mubr.f32.gmra.mrb[0].mxu0 %v872
    %v940 = vpop.f32.mrb[0].mxu0
    %v941 = vadd.f32 0.0, %v940
    %v942 = vpop.f32.mrb[0].mxu0
    %v943 = vadd.f32 0.0, %v942
    %944 = vdwg.mxu0
    %v945 = vadd.f32 %v843, %v941
    %v946 = vadd.f32 %v844, %v943
    %v947 = vld [vmem:[%s4] sm:$0xff]
    %949 = vset.pattern.permute.xlu0 0
    %950 = vperm.xlu0 %949, %v947
    %v951 = vpop.permute.xlu0 %950
    %v953 = vadd.f32 %v945, %v951
    %v954 = vadd.f32 %v946, %v951
    %v955 = vadd.f32 %v953, %v954
    %956 = vadd.xlane.f32.xlu0 %v955
    %v957 = vpop.xlane.xlu0 %956
    %v959 = vsel %vm93, %v42, 0
    %961 = vmatprep.subr.mxu0 0.0
    %962 = vmatpush1.msra.mxu0 %v957
    %963 = vmatprep.subr.mxu0 0.0
    %964 = vmatpush1.msra.mxu0 0.0
    %965 = vmatprep.subr.mxu0 0.0
    %966 = vmatpush1.msra.mxu0 0.0
    %967 = vmatprep.subr.mxu0 0.0
    %968 = vmatpush1.msra.mxu0 0.0
    %969 = vmatprep.subr.mxu0 0.0
    %970 = vmatpush1.msra.mxu0 0.0
    %971 = vmatprep.subr.mxu0 0.0
    %972 = vmatpush1.msra.mxu0 0.0
    %973 = vmatprep.subr.mxu0 0.0
    %974 = vmatpush1.msra.mxu0 0.0
    %975 = vmatprep.subr.mxu0 0.0
    %976 = vmatpush1.msra.mxu0 0.0
    %977 = vmatprep.subr.mxu0 0.0
    %978 = vmatpush1.msra.mxu0 0.0
    %979 = vmatprep.subr.mxu0 0.0
    %980 = vmatpush1.msra.mxu0 0.0
    %981 = vmatprep.subr.mxu0 0.0
    %982 = vmatpush1.msra.mxu0 0.0
    %983 = vmatprep.subr.mxu0 0.0
    %984 = vmatpush1.msra.mxu0 0.0
    %985 = vmatprep.subr.mxu0 0.0
    %986 = vmatpush1.msra.mxu0 0.0
    %987 = vmatprep.subr.mxu0 0.0
    %988 = vmatpush1.msra.mxu0 0.0
    %989 = vmatprep.subr.mxu0 0.0
    %990 = vmatpush1.msra.mxu0 0.0
    %991 = vmatprep.subr.mxu0 0.0
    %992 = vmatpush1.msra.mxu0 0.0
    %993 = vmatprep.subr.mxu0 0.0
    %994 = vmatpush1.msra.mxu0 0.0
    %995 = vmatprep.subr.mxu0 0.0
    %996 = vmatpush1.msra.mxu0 0.0
    %997 = vmatprep.subr.mxu0 0.0
    %998 = vmatpush1.msra.mxu0 0.0
    %999 = vmatprep.subr.mxu0 0.0
    %1000 = vmatpush1.msra.mxu0 0.0
    %1001 = vmatprep.subr.mxu0 0.0
    %1002 = vmatpush1.msra.mxu0 0.0
    %1003 = vmatprep.subr.mxu0 0.0
    %1004 = vmatpush1.msra.mxu0 0.0
    %1005 = vmatprep.subr.mxu0 0.0
    %1006 = vmatpush1.msra.mxu0 0.0
    %1007 = vmatprep.subr.mxu0 0.0
    %1008 = vmatpush1.msra.mxu0 0.0
    %1009 = vmatprep.subr.mxu0 0.0
    %1010 = vmatpush1.msra.mxu0 0.0
    %1011 = vmatprep.subr.mxu0 0.0
    %1012 = vmatpush1.msra.mxu0 0.0
    %1013 = vmatprep.subr.mxu0 0.0
    %1014 = vmatpush1.msra.mxu0 0.0
    %1015 = vmatprep.subr.mxu0 0.0
    %1016 = vmatpush1.msra.mxu0 0.0
    %1017 = vmatprep.subr.mxu0 0.0
    %1018 = vmatpush1.msra.mxu0 0.0
    %1019 = vmatprep.subr.mxu0 0.0
    %1020 = vmatpush1.msra.mxu0 0.0
    %1021 = vmatprep.subr.mxu0 0.0
    %1022 = vmatpush1.msra.mxu0 0.0
    %1023 = vmatprep.subr.mxu0 0.0
    %1024 = vmatpush1.msra.mxu0 0.0
    %1025 = vmatprep.mubr.f32.mxu0 0.0
    %1026 = vmatmul.mubr.f32.gmra.mrb[0].mxu0 %v959
    %v1027 = vpop.f32.mrb[0].mxu0
    %v1028 = vadd.f32 0.0, %v1027
    %v1029 = vpop.f32.mrb[0].mxu0
    %1030 = vdwg.mxu0
    %v1031 = vmul.f32 %v953, %v953
    %v1032 = vmul.f32 %v954, %v954
    %v1033 = vadd.f32 %v1031, %v1032
    %1034 = vadd.xlane.f32.xlu0 %v1033
    %v1035 = vpop.xlane.xlu0 %1034
    %1036 = vmatprep.subr.mxu0 0.0
    %1037 = vmatpush1.msra.mxu0 %v1035
    %1038 = vmatprep.subr.mxu0 0.0
    %1039 = vmatpush1.msra.mxu0 0.0
    %1040 = vmatprep.subr.mxu0 0.0
    %1041 = vmatpush1.msra.mxu0 0.0
    %1042 = vmatprep.subr.mxu0 0.0
    %1043 = vmatpush1.msra.mxu0 0.0
    %1044 = vmatprep.subr.mxu0 0.0
    %1045 = vmatpush1.msra.mxu0 0.0
    %1046 = vmatprep.subr.mxu0 0.0
    %1047 = vmatpush1.msra.mxu0 0.0
    %1048 = vmatprep.subr.mxu0 0.0
    %1049 = vmatpush1.msra.mxu0 0.0
    %1050 = vmatprep.subr.mxu0 0.0
    %1051 = vmatpush1.msra.mxu0 0.0
    %1052 = vmatprep.subr.mxu0 0.0
    %1053 = vmatpush1.msra.mxu0 0.0
    %1054 = vmatprep.subr.mxu0 0.0
    %1055 = vmatpush1.msra.mxu0 0.0
    %1056 = vmatprep.subr.mxu0 0.0
    %1057 = vmatpush1.msra.mxu0 0.0
    %1058 = vmatprep.subr.mxu0 0.0
    %1059 = vmatpush1.msra.mxu0 0.0
    %1060 = vmatprep.subr.mxu0 0.0
    %1061 = vmatpush1.msra.mxu0 0.0
    %1062 = vmatprep.subr.mxu0 0.0
    %1063 = vmatpush1.msra.mxu0 0.0
    %1064 = vmatprep.subr.mxu0 0.0
    %1065 = vmatpush1.msra.mxu0 0.0
    %1066 = vmatprep.subr.mxu0 0.0
    %1067 = vmatpush1.msra.mxu0 0.0
    %1068 = vmatprep.subr.mxu0 0.0
    %1069 = vmatpush1.msra.mxu0 0.0
    %1070 = vmatprep.subr.mxu0 0.0
    %1071 = vmatpush1.msra.mxu0 0.0
    %1072 = vmatprep.subr.mxu0 0.0
    %1073 = vmatpush1.msra.mxu0 0.0
    %1074 = vmatprep.subr.mxu0 0.0
    %1075 = vmatpush1.msra.mxu0 0.0
    %1076 = vmatprep.subr.mxu0 0.0
    %1077 = vmatpush1.msra.mxu0 0.0
    %1078 = vmatprep.subr.mxu0 0.0
    %1079 = vmatpush1.msra.mxu0 0.0
    %1080 = vmatprep.subr.mxu0 0.0
    %1081 = vmatpush1.msra.mxu0 0.0
    %1082 = vmatprep.subr.mxu0 0.0
    %1083 = vmatpush1.msra.mxu0 0.0
    %1084 = vmatprep.subr.mxu0 0.0
    %1085 = vmatpush1.msra.mxu0 0.0
    %1086 = vmatprep.subr.mxu0 0.0
    %1087 = vmatpush1.msra.mxu0 0.0
    %1088 = vmatprep.subr.mxu0 0.0
    %1089 = vmatpush1.msra.mxu0 0.0
    %1090 = vmatprep.subr.mxu0 0.0
    %1091 = vmatpush1.msra.mxu0 0.0
    %1092 = vmatprep.subr.mxu0 0.0
    %1093 = vmatpush1.msra.mxu0 0.0
    %1094 = vmatprep.subr.mxu0 0.0
    %1095 = vmatpush1.msra.mxu0 0.0
    %1096 = vmatprep.subr.mxu0 0.0
    %1097 = vmatpush1.msra.mxu0 0.0
    %1098 = vmatprep.subr.mxu0 0.0
    %1099 = vmatpush1.msra.mxu0 0.0
    %1100 = vmatprep.mubr.f32.mxu0 0.0
    %1101 = vmatmul.mubr.f32.gmra.mrb[0].mxu0 %v959
    %v1102 = vpop.f32.mrb[0].mxu0
    %v1103 = vadd.f32 0.0, %v1102
    %v1104 = vpop.f32.mrb[0].mxu0
    %1105 = vdwg.mxu0
    %v1106 = vmul.f32 %v1028, 0.001953125
    %v1107 = vmul.f32 %v1103, 0.001953125
    %v1108 = vmul.f32 %v1106, %v1106
    %v1109 = vsub.f32 %v1107, %v1108
    %v1110 = vmax.f32 %v1109, 0.0
    %v1111 = vld [vmem:[%s5] sm:$0xff]
    %v1112 = vadd.f32 %v1110, 1e-05
    %v1113 = vrsqrt.pop %v1112
    %v1114 = vmul.f32 %v1111, %v1113
    %v1115 = vld [vmem:[%s6] sm:$0xff]
    %v1116 = vmul.f32 %v1106, %v1114
    %v1117 = vsub.f32 %v1115, %v1116
    %1119 = vset.pattern.permute.xlu0 0
    %1120 = vperm.xlu0 %1119, %v1114
    %v1121 = vpop.permute.xlu0 %1120
    %v1123 = vmul.f32 %v953, %v1121
    %v1124 = vmul.f32 %v954, %v1121
    %1126 = vset.pattern.permute.xlu0 0
    %1127 = vperm.xlu0 %1126, %v1117
    %v1128 = vpop.permute.xlu0 %1127
    %v1130 = vadd.f32 %v1123, %v1128
    %v1131 = vadd.f32 %v1124, %v1128
    %v1132 = vmax.f32 %v1130, 0.0
    %v1133 = vmax.f32 %v1131, 0.0
    %1134 = vst [vmem:[#allocation2 + $0x8] sm:$0xff] %v1132
    %1135 = vst [vmem:[#allocation2 + $0x10] sm:$0xff] %v1133
    %v1136 = vld [vmem:[#allocation2] sm:$0xff]
    %v1137 = vld [vmem:[#allocation2 + $0x8] sm:$0xff]
    %v1138 = vld [vmem:[#allocation2 + $0x10] sm:$0xff]
    %v1139 = vld [vmem:[#allocation2 + $0x18] sm:$0xff]
    %v1140 = vmul.f32 %v1136, %v65
    %v1141 = vmul.f32 %v1137, %v69
    %v1142 = vmul.f32 %v1138, %v67
    %v1143 = vld [vmem:[%s7] sm:$0xff]
    %s1144 = scalar_lea.vmem %s7, 8
    %v1145 = vld [vmem:[%s1144] sm:$0xff]
    %1149 = vrot.lane.b32.xlu0 %v1136, 16
    %v1150 = vpop.permute.xlu0 %1149
    %1151 = vrot.lane.b32.xlu0 %v1137, 16
    %v1152 = vpop.permute.xlu0 %1151
    %1153 = vrot.lane.b32.xlu0 %v1138, 16
    %v1154 = vpop.permute.xlu0 %1153
    %v1155 = vsel %vm88, %v1150, %v1152
    %v1156 = vsel %vm88, %v1152, %v1154
    %v1160 = vsel %vm93, %v1145, 0
    %1162 = vmatprep.subr.mxu0 %v1156
    %1163 = vmatpush1.msra.mxu0 %v1155
    %1164 = vmatprep.subr.mxu0 0.0
    %1165 = vmatpush1.msra.mxu0 0.0
    %1166 = vmatprep.subr.mxu0 0.0
    %1167 = vmatpush1.msra.mxu0 0.0
    %1168 = vmatprep.subr.mxu0 0.0
    %1169 = vmatpush1.msra.mxu0 0.0
    %1170 = vmatprep.subr.mxu0 0.0
    %1171 = vmatpush1.msra.mxu0 0.0
    %1172 = vmatprep.subr.mxu0 0.0
    %1173 = vmatpush1.msra.mxu0 0.0
    %1174 = vmatprep.subr.mxu0 0.0
    %1175 = vmatpush1.msra.mxu0 0.0
    %1176 = vmatprep.subr.mxu0 0.0
    %1177 = vmatpush1.msra.mxu0 0.0
    %1178 = vmatprep.subr.mxu0 0.0
    %1179 = vmatpush1.msra.mxu0 0.0
    %1180 = vmatprep.subr.mxu0 0.0
    %1181 = vmatpush1.msra.mxu0 0.0
    %1182 = vmatprep.subr.mxu0 0.0
    %1183 = vmatpush1.msra.mxu0 0.0
    %1184 = vmatprep.subr.mxu0 0.0
    %1185 = vmatpush1.msra.mxu0 0.0
    %1186 = vmatprep.subr.mxu0 0.0
    %1187 = vmatpush1.msra.mxu0 0.0
    %1188 = vmatprep.subr.mxu0 0.0
    %1189 = vmatpush1.msra.mxu0 0.0
    %1190 = vmatprep.subr.mxu0 0.0
    %1191 = vmatpush1.msra.mxu0 0.0
    %1192 = vmatprep.subr.mxu0 0.0
    %1193 = vmatpush1.msra.mxu0 0.0
    %1194 = vmatprep.subr.mxu0 0.0
    %1195 = vmatpush1.msra.mxu0 0.0
    %1196 = vmatprep.subr.mxu0 0.0
    %1197 = vmatpush1.msra.mxu0 0.0
    %1198 = vmatprep.subr.mxu0 0.0
    %1199 = vmatpush1.msra.mxu0 0.0
    %1200 = vmatprep.subr.mxu0 0.0
    %1201 = vmatpush1.msra.mxu0 0.0
    %1202 = vmatprep.subr.mxu0 0.0
    %1203 = vmatpush1.msra.mxu0 0.0
    %1204 = vmatprep.subr.mxu0 0.0
    %1205 = vmatpush1.msra.mxu0 0.0
    %1206 = vmatprep.subr.mxu0 0.0
    %1207 = vmatpush1.msra.mxu0 0.0
    %1208 = vmatprep.subr.mxu0 0.0
    %1209 = vmatpush1.msra.mxu0 0.0
    %1210 = vmatprep.subr.mxu0 0.0
    %1211 = vmatpush1.msra.mxu0 0.0
    %1212 = vmatprep.subr.mxu0 0.0
    %1213 = vmatpush1.msra.mxu0 0.0
    %1214 = vmatprep.subr.mxu0 0.0
    %1215 = vmatpush1.msra.mxu0 0.0
    %1216 = vmatprep.subr.mxu0 0.0
    %1217 = vmatpush1.msra.mxu0 0.0
    %1218 = vmatprep.subr.mxu0 0.0
    %1219 = vmatpush1.msra.mxu0 0.0
    %1220 = vmatprep.subr.mxu0 0.0
    %1221 = vmatpush1.msra.mxu0 0.0
    %1222 = vmatprep.subr.mxu0 0.0
    %1223 = vmatpush1.msra.mxu0 0.0
    %1224 = vmatprep.subr.mxu0 0.0
    %1225 = vmatpush1.msra.mxu0 0.0
    %1226 = vmatprep.mubr.f32.mxu0 0.0
    %1227 = vmatmul.mubr.f32.gmra.mrb[0].mxu0 %v1160
    %v1228 = vpop.f32.mrb[0].mxu0
    %v1229 = vadd.f32 0.0, %v1228
    %v1230 = vpop.f32.mrb[0].mxu0
    %v1231 = vadd.f32 0.0, %v1230
    %1232 = vdwg.mxu0
    %1236 = vrot.lane.b32.xlu0 %v1140, 17
    %v1237 = vpop.permute.xlu0 %1236
    %1238 = vrot.lane.b32.xlu0 %v1141, 17
    %v1239 = vpop.permute.xlu0 %1238
    %1240 = vrot.lane.b32.xlu0 %v1142, 17
    %v1241 = vpop.permute.xlu0 %1240
    %v1242 = vsel %vm177, %v1237, %v1239
    %v1243 = vsel %vm177, %v1239, %v1241
    %v1247 = vsel %vm93, %v1143, 0
    %1249 = vmatprep.subr.mxu0 %v1243
    %1250 = vmatpush1.msra.mxu0 %v1242
    %1251 = vmatprep.subr.mxu0 0.0
    %1252 = vmatpush1.msra.mxu0 0.0
    %1253 = vmatprep.subr.mxu0 0.0
    %1254 = vmatpush1.msra.mxu0 0.0
    %1255 = vmatprep.subr.mxu0 0.0
    %1256 = vmatpush1.msra.mxu0 0.0
    %1257 = vmatprep.subr.mxu0 0.0
    %1258 = vmatpush1.msra.mxu0 0.0
    %1259 = vmatprep.subr.mxu0 0.0
    %1260 = vmatpush1.msra.mxu0 0.0
    %1261 = vmatprep.subr.mxu0 0.0
    %1262 = vmatpush1.msra.mxu0 0.0
    %1263 = vmatprep.subr.mxu0 0.0
    %1264 = vmatpush1.msra.mxu0 0.0
    %1265 = vmatprep.subr.mxu0 0.0
    %1266 = vmatpush1.msra.mxu0 0.0
    %1267 = vmatprep.subr.mxu0 0.0
    %1268 = vmatpush1.msra.mxu0 0.0
    %1269 = vmatprep.subr.mxu0 0.0
    %1270 = vmatpush1.msra.mxu0 0.0
    %1271 = vmatprep.subr.mxu0 0.0
    %1272 = vmatpush1.msra.mxu0 0.0
    %1273 = vmatprep.subr.mxu0 0.0
    %1274 = vmatpush1.msra.mxu0 0.0
    %1275 = vmatprep.subr.mxu0 0.0
    %1276 = vmatpush1.msra.mxu0 0.0
    %1277 = vmatprep.subr.mxu0 0.0
    %1278 = vmatpush1.msra.mxu0 0.0
    %1279 = vmatprep.subr.mxu0 0.0
    %1280 = vmatpush1.msra.mxu0 0.0
    %1281 = vmatprep.subr.mxu0 0.0
    %1282 = vmatpush1.msra.mxu0 0.0
    %1283 = vmatprep.subr.mxu0 0.0
    %1284 = vmatpush1.msra.mxu0 0.0
    %1285 = vmatprep.subr.mxu0 0.0
    %1286 = vmatpush1.msra.mxu0 0.0
    %1287 = vmatprep.subr.mxu0 0.0
    %1288 = vmatpush1.msra.mxu0 0.0
    %1289 = vmatprep.subr.mxu0 0.0
    %1290 = vmatpush1.msra.mxu0 0.0
    %1291 = vmatprep.subr.mxu0 0.0
    %1292 = vmatpush1.msra.mxu0 0.0
    %1293 = vmatprep.subr.mxu0 0.0
    %1294 = vmatpush1.msra.mxu0 0.0
    %1295 = vmatprep.subr.mxu0 0.0
    %1296 = vmatpush1.msra.mxu0 0.0
    %1297 = vmatprep.subr.mxu0 0.0
    %1298 = vmatpush1.msra.mxu0 0.0
    %1299 = vmatprep.subr.mxu0 0.0
    %1300 = vmatpush1.msra.mxu0 0.0
    %1301 = vmatprep.subr.mxu0 0.0
    %1302 = vmatpush1.msra.mxu0 0.0
    %1303 = vmatprep.subr.mxu0 0.0
    %1304 = vmatpush1.msra.mxu0 0.0
    %1305 = vmatprep.subr.mxu0 0.0
    %1306 = vmatpush1.msra.mxu0 0.0
    %1307 = vmatprep.subr.mxu0 0.0
    %1308 = vmatpush1.msra.mxu0 0.0
    %1309 = vmatprep.subr.mxu0 0.0
    %1310 = vmatpush1.msra.mxu0 0.0
    %1311 = vmatprep.subr.mxu0 0.0
    %1312 = vmatpush1.msra.mxu0 0.0
    %1313 = vmatprep.mubr.f32.mxu0 0.0
    %1314 = vmatmul.mubr.f32.gmra.mrb[0].mxu0 %v1247
    %v1315 = vpop.f32.mrb[0].mxu0
    %v1316 = vadd.f32 %v1229, %v1315
    %v1317 = vpop.f32.mrb[0].mxu0
    %v1318 = vadd.f32 %v1231, %v1317
    %1319 = vdwg.mxu0
    %v1320 = vmul.f32 %v1136, %v266
    %v1321 = vmul.f32 %v1137, %v270
    %v1322 = vmul.f32 %v1138, %v268
    %s1323 = scalar_lea.vmem %s7, 16
    %v1324 = vld [vmem:[%s1323] sm:$0xff]
    %1328 = vrot.lane.b32.xlu0 %v1320, 15
    %v1329 = vpop.permute.xlu0 %1328
    %1330 = vrot.lane.b32.xlu0 %v1321, 15
    %v1331 = vpop.permute.xlu0 %1330
    %1332 = vrot.lane.b32.xlu0 %v1322, 15
    %v1333 = vpop.permute.xlu0 %1332
    %v1334 = vsel %vm288, %v1329, %v1331
    %v1335 = vsel %vm288, %v1331, %v1333
    %v1339 = vsel %vm93, %v1324, 0
    %1341 = vmatprep.subr.mxu0 %v1335
    %1342 = vmatpush1.msra.mxu0 %v1334
    %1343 = vmatprep.subr.mxu0 0.0
    %1344 = vmatpush1.msra.mxu0 0.0
    %1345 = vmatprep.subr.mxu0 0.0
    %1346 = vmatpush1.msra.mxu0 0.0
    %1347 = vmatprep.subr.mxu0 0.0
    %1348 = vmatpush1.msra.mxu0 0.0
    %1349 = vmatprep.subr.mxu0 0.0
    %1350 = vmatpush1.msra.mxu0 0.0
    %1351 = vmatprep.subr.mxu0 0.0
    %1352 = vmatpush1.msra.mxu0 0.0
    %1353 = vmatprep.subr.mxu0 0.0
    %1354 = vmatpush1.msra.mxu0 0.0
    %1355 = vmatprep.subr.mxu0 0.0
    %1356 = vmatpush1.msra.mxu0 0.0
    %1357 = vmatprep.subr.mxu0 0.0
    %1358 = vmatpush1.msra.mxu0 0.0
    %1359 = vmatprep.subr.mxu0 0.0
    %1360 = vmatpush1.msra.mxu0 0.0
    %1361 = vmatprep.subr.mxu0 0.0
    %1362 = vmatpush1.msra.mxu0 0.0
    %1363 = vmatprep.subr.mxu0 0.0
    %1364 = vmatpush1.msra.mxu0 0.0
    %1365 = vmatprep.subr.mxu0 0.0
    %1366 = vmatpush1.msra.mxu0 0.0
    %1367 = vmatprep.subr.mxu0 0.0
    %1368 = vmatpush1.msra.mxu0 0.0
    %1369 = vmatprep.subr.mxu0 0.0
    %1370 = vmatpush1.msra.mxu0 0.0
    %1371 = vmatprep.subr.mxu0 0.0
    %1372 = vmatpush1.msra.mxu0 0.0
    %1373 = vmatprep.subr.mxu0 0.0
    %1374 = vmatpush1.msra.mxu0 0.0
    %1375 = vmatprep.subr.mxu0 0.0
    %1376 = vmatpush1.msra.mxu0 0.0
    %1377 = vmatprep.subr.mxu0 0.0
    %1378 = vmatpush1.msra.mxu0 0.0
    %1379 = vmatprep.subr.mxu0 0.0
    %1380 = vmatpush1.msra.mxu0 0.0
    %1381 = vmatprep.subr.mxu0 0.0
    %1382 = vmatpush1.msra.mxu0 0.0
    %1383 = vmatprep.subr.mxu0 0.0
    %1384 = vmatpush1.msra.mxu0 0.0
    %1385 = vmatprep.subr.mxu0 0.0
    %1386 = vmatpush1.msra.mxu0 0.0
    %1387 = vmatprep.subr.mxu0 0.0
    %1388 = vmatpush1.msra.mxu0 0.0
    %1389 = vmatprep.subr.mxu0 0.0
    %1390 = vmatpush1.msra.mxu0 0.0
    %1391 = vmatprep.subr.mxu0 0.0
    %1392 = vmatpush1.msra.mxu0 0.0
    %1393 = vmatprep.subr.mxu0 0.0
    %1394 = vmatpush1.msra.mxu0 0.0
    %1395 = vmatprep.subr.mxu0 0.0
    %1396 = vmatpush1.msra.mxu0 0.0
    %1397 = vmatprep.subr.mxu0 0.0
    %1398 = vmatpush1.msra.mxu0 0.0
    %1399 = vmatprep.subr.mxu0 0.0
    %1400 = vmatpush1.msra.mxu0 0.0
    %1401 = vmatprep.subr.mxu0 0.0
    %1402 = vmatpush1.msra.mxu0 0.0
    %1403 = vmatprep.subr.mxu0 0.0
    %1404 = vmatpush1.msra.mxu0 0.0
    %1405 = vmatprep.mubr.f32.mxu0 0.0
    %1406 = vmatmul.mubr.f32.gmra.mrb[0].mxu0 %v1339
    %v1407 = vpop.f32.mrb[0].mxu0
    %v1408 = vadd.f32 0.0, %v1407
    %v1409 = vpop.f32.mrb[0].mxu0
    %v1410 = vadd.f32 0.0, %v1409
    %1411 = vdwg.mxu0
    %v1412 = vadd.f32 %v1316, %v1408
    %v1413 = vadd.f32 %v1318, %v1410
    %v1414 = vmul.f32 %v1136, %v370
    %v1415 = vmul.f32 %v1137, %v374
    %v1416 = vmul.f32 %v1138, %v372
    %s1417 = scalar_lea.vmem %s7, 24
    %v1418 = vld [vmem:[%s1417] sm:$0xff]
    %1422 = vrot.lane.b32.xlu0 %v1414, 1
    %v1423 = vpop.permute.xlu0 %1422
    %1424 = vrot.lane.b32.xlu0 %v1415, 1
    %v1425 = vpop.permute.xlu0 %1424
    %1426 = vrot.lane.b32.xlu0 %v1416, 1
    %v1427 = vpop.permute.xlu0 %1426
    %v1428 = vsel %vm392, %v1423, %v1425
    %v1429 = vsel %vm392, %v1425, %v1427
    %v1433 = vsel %vm93, %v1418, 0
    %1435 = vmatprep.subr.mxu0 %v1429
    %1436 = vmatpush1.msra.mxu0 %v1428
    %1437 = vmatprep.subr.mxu0 0.0
    %1438 = vmatpush1.msra.mxu0 0.0
    %1439 = vmatprep.subr.mxu0 0.0
    %1440 = vmatpush1.msra.mxu0 0.0
    %1441 = vmatprep.subr.mxu0 0.0
    %1442 = vmatpush1.msra.mxu0 0.0
    %1443 = vmatprep.subr.mxu0 0.0
    %1444 = vmatpush1.msra.mxu0 0.0
    %1445 = vmatprep.subr.mxu0 0.0
    %1446 = vmatpush1.msra.mxu0 0.0
    %1447 = vmatprep.subr.mxu0 0.0
    %1448 = vmatpush1.msra.mxu0 0.0
    %1449 = vmatprep.subr.mxu0 0.0
    %1450 = vmatpush1.msra.mxu0 0.0
    %1451 = vmatprep.subr.mxu0 0.0
    %1452 = vmatpush1.msra.mxu0 0.0
    %1453 = vmatprep.subr.mxu0 0.0
    %1454 = vmatpush1.msra.mxu0 0.0
    %1455 = vmatprep.subr.mxu0 0.0
    %1456 = vmatpush1.msra.mxu0 0.0
    %1457 = vmatprep.subr.mxu0 0.0
    %1458 = vmatpush1.msra.mxu0 0.0
    %1459 = vmatprep.subr.mxu0 0.0
    %1460 = vmatpush1.msra.mxu0 0.0
    %1461 = vmatprep.subr.mxu0 0.0
    %1462 = vmatpush1.msra.mxu0 0.0
    %1463 = vmatprep.subr.mxu0 0.0
    %1464 = vmatpush1.msra.mxu0 0.0
    %1465 = vmatprep.subr.mxu0 0.0
    %1466 = vmatpush1.msra.mxu0 0.0
    %1467 = vmatprep.subr.mxu0 0.0
    %1468 = vmatpush1.msra.mxu0 0.0
    %1469 = vmatprep.subr.mxu0 0.0
    %1470 = vmatpush1.msra.mxu0 0.0
    %1471 = vmatprep.subr.mxu0 0.0
    %1472 = vmatpush1.msra.mxu0 0.0
    %1473 = vmatprep.subr.mxu0 0.0
    %1474 = vmatpush1.msra.mxu0 0.0
    %1475 = vmatprep.subr.mxu0 0.0
    %1476 = vmatpush1.msra.mxu0 0.0
    %1477 = vmatprep.subr.mxu0 0.0
    %1478 = vmatpush1.msra.mxu0 0.0
    %1479 = vmatprep.subr.mxu0 0.0
    %1480 = vmatpush1.msra.mxu0 0.0
    %1481 = vmatprep.subr.mxu0 0.0
    %1482 = vmatpush1.msra.mxu0 0.0
    %1483 = vmatprep.subr.mxu0 0.0
    %1484 = vmatpush1.msra.mxu0 0.0
    %1485 = vmatprep.subr.mxu0 0.0
    %1486 = vmatpush1.msra.mxu0 0.0
    %1487 = vmatprep.subr.mxu0 0.0
    %1488 = vmatpush1.msra.mxu0 0.0
    %1489 = vmatprep.subr.mxu0 0.0
    %1490 = vmatpush1.msra.mxu0 0.0
    %1491 = vmatprep.subr.mxu0 0.0
    %1492 = vmatpush1.msra.mxu0 0.0
    %1493 = vmatprep.subr.mxu0 0.0
    %1494 = vmatpush1.msra.mxu0 0.0
    %1495 = vmatprep.subr.mxu0 0.0
    %1496 = vmatpush1.msra.mxu0 0.0
    %1497 = vmatprep.subr.mxu0 0.0
    %1498 = vmatpush1.msra.mxu0 0.0
    %1499 = vmatprep.mubr.f32.mxu0 0.0
    %1500 = vmatmul.mubr.f32.gmra.mrb[0].mxu0 %v1433
    %v1501 = vpop.f32.mrb[0].mxu0
    %v1502 = vadd.f32 0.0, %v1501
    %v1503 = vpop.f32.mrb[0].mxu0
    %v1504 = vadd.f32 0.0, %v1503
    %1505 = vdwg.mxu0
    %v1506 = vadd.f32 %v1412, %v1502
    %v1507 = vadd.f32 %v1413, %v1504
    %s1508 = scalar_lea.vmem %s7, 32
    %v1509 = vld [vmem:[%s1508] sm:$0xff]
    %v1511 = vsel %vm93, %v1509, 0
    %1513 = vmatprep.subr.mxu0 %v1138
    %1514 = vmatpush1.msra.mxu0 %v1137
    %1515 = vmatprep.subr.mxu0 0.0
    %1516 = vmatpush1.msra.mxu0 0.0
    %1517 = vmatprep.subr.mxu0 0.0
    %1518 = vmatpush1.msra.mxu0 0.0
    %1519 = vmatprep.subr.mxu0 0.0
    %1520 = vmatpush1.msra.mxu0 0.0
    %1521 = vmatprep.subr.mxu0 0.0
    %1522 = vmatpush1.msra.mxu0 0.0
    %1523 = vmatprep.subr.mxu0 0.0
    %1524 = vmatpush1.msra.mxu0 0.0
    %1525 = vmatprep.subr.mxu0 0.0
    %1526 = vmatpush1.msra.mxu0 0.0
    %1527 = vmatprep.subr.mxu0 0.0
    %1528 = vmatpush1.msra.mxu0 0.0
    %1529 = vmatprep.subr.mxu0 0.0
    %1530 = vmatpush1.msra.mxu0 0.0
    %1531 = vmatprep.subr.mxu0 0.0
    %1532 = vmatpush1.msra.mxu0 0.0
    %1533 = vmatprep.subr.mxu0 0.0
    %1534 = vmatpush1.msra.mxu0 0.0
    %1535 = vmatprep.subr.mxu0 0.0
    %1536 = vmatpush1.msra.mxu0 0.0
    %1537 = vmatprep.subr.mxu0 0.0
    %1538 = vmatpush1.msra.mxu0 0.0
    %1539 = vmatprep.subr.mxu0 0.0
    %1540 = vmatpush1.msra.mxu0 0.0
    %1541 = vmatprep.subr.mxu0 0.0
    %1542 = vmatpush1.msra.mxu0 0.0
    %1543 = vmatprep.subr.mxu0 0.0
    %1544 = vmatpush1.msra.mxu0 0.0
    %1545 = vmatprep.subr.mxu0 0.0
    %1546 = vmatpush1.msra.mxu0 0.0
    %1547 = vmatprep.subr.mxu0 0.0
    %1548 = vmatpush1.msra.mxu0 0.0
    %1549 = vmatprep.subr.mxu0 0.0
    %1550 = vmatpush1.msra.mxu0 0.0
    %1551 = vmatprep.subr.mxu0 0.0
    %1552 = vmatpush1.msra.mxu0 0.0
    %1553 = vmatprep.subr.mxu0 0.0
    %1554 = vmatpush1.msra.mxu0 0.0
    %1555 = vmatprep.subr.mxu0 0.0
    %1556 = vmatpush1.msra.mxu0 0.0
    %1557 = vmatprep.subr.mxu0 0.0
    %1558 = vmatpush1.msra.mxu0 0.0
    %1559 = vmatprep.subr.mxu0 0.0
    %1560 = vmatpush1.msra.mxu0 0.0
    %1561 = vmatprep.subr.mxu0 0.0
    %1562 = vmatpush1.msra.mxu0 0.0
    %1563 = vmatprep.subr.mxu0 0.0
    %1564 = vmatpush1.msra.mxu0 0.0
    %1565 = vmatprep.subr.mxu0 0.0
    %1566 = vmatpush1.msra.mxu0 0.0
    %1567 = vmatprep.subr.mxu0 0.0
    %1568 = vmatpush1.msra.mxu0 0.0
    %1569 = vmatprep.subr.mxu0 0.0
    %1570 = vmatpush1.msra.mxu0 0.0
    %1571 = vmatprep.subr.mxu0 0.0
    %1572 = vmatpush1.msra.mxu0 0.0
    %1573 = vmatprep.subr.mxu0 0.0
    %1574 = vmatpush1.msra.mxu0 0.0
    %1575 = vmatprep.subr.mxu0 0.0
    %1576 = vmatpush1.msra.mxu0 0.0
    %1577 = vmatprep.mubr.f32.mxu0 0.0
    %1578 = vmatmul.mubr.f32.gmra.mrb[0].mxu0 %v1511
    %v1579 = vpop.f32.mrb[0].mxu0
    %v1580 = vadd.f32 0.0, %v1579
    %v1581 = vpop.f32.mrb[0].mxu0
    %v1582 = vadd.f32 0.0, %v1581
    %1583 = vdwg.mxu0
    %v1584 = vadd.f32 %v1506, %v1580
    %v1585 = vadd.f32 %v1507, %v1582
    %v1586 = vmul.f32 %v1137, %v552
    %v1587 = vmul.f32 %v1138, %v555
    %v1588 = vmul.f32 %v1139, %v554
    %s1589 = scalar_lea.vmem %s7, 40
    %v1590 = vld [vmem:[%s1589] sm:$0xff]
    %1594 = vrot.lane.b32.xlu0 %v1586, 127
    %v1595 = vpop.permute.xlu0 %1594
    %1596 = vrot.lane.b32.xlu0 %v1587, 127
    %v1597 = vpop.permute.xlu0 %1596
    %1598 = vrot.lane.b32.xlu0 %v1588, 127
    %v1599 = vpop.permute.xlu0 %1598
    %v1600 = vsel %vm373, %v1595, %v1597
    %v1601 = vsel %vm373, %v1597, %v1599
    %v1605 = vsel %vm93, %v1590, 0
    %1607 = vmatprep.subr.mxu0 %v1601
    %1608 = vmatpush1.msra.mxu0 %v1600
    %1609 = vmatprep.subr.mxu0 0.0
    %1610 = vmatpush1.msra.mxu0 0.0
    %1611 = vmatprep.subr.mxu0 0.0
    %1612 = vmatpush1.msra.mxu0 0.0
    %1613 = vmatprep.subr.mxu0 0.0
    %1614 = vmatpush1.msra.mxu0 0.0
    %1615 = vmatprep.subr.mxu0 0.0
    %1616 = vmatpush1.msra.mxu0 0.0
    %1617 = vmatprep.subr.mxu0 0.0
    %1618 = vmatpush1.msra.mxu0 0.0
    %1619 = vmatprep.subr.mxu0 0.0
    %1620 = vmatpush1.msra.mxu0 0.0
    %1621 = vmatprep.subr.mxu0 0.0
    %1622 = vmatpush1.msra.mxu0 0.0
    %1623 = vmatprep.subr.mxu0 0.0
    %1624 = vmatpush1.msra.mxu0 0.0
    %1625 = vmatprep.subr.mxu0 0.0
    %1626 = vmatpush1.msra.mxu0 0.0
    %1627 = vmatprep.subr.mxu0 0.0
    %1628 = vmatpush1.msra.mxu0 0.0
    %1629 = vmatprep.subr.mxu0 0.0
    %1630 = vmatpush1.msra.mxu0 0.0
    %1631 = vmatprep.subr.mxu0 0.0
    %1632 = vmatpush1.msra.mxu0 0.0
    %1633 = vmatprep.subr.mxu0 0.0
    %1634 = vmatpush1.msra.mxu0 0.0
    %1635 = vmatprep.subr.mxu0 0.0
    %1636 = vmatpush1.msra.mxu0 0.0
    %1637 = vmatprep.subr.mxu0 0.0
    %1638 = vmatpush1.msra.mxu0 0.0
    %1639 = vmatprep.subr.mxu0 0.0
    %1640 = vmatpush1.msra.mxu0 0.0
    %1641 = vmatprep.subr.mxu0 0.0
    %1642 = vmatpush1.msra.mxu0 0.0
    %1643 = vmatprep.subr.mxu0 0.0
    %1644 = vmatpush1.msra.mxu0 0.0
    %1645 = vmatprep.subr.mxu0 0.0
    %1646 = vmatpush1.msra.mxu0 0.0
    %1647 = vmatprep.subr.mxu0 0.0
    %1648 = vmatpush1.msra.mxu0 0.0
    %1649 = vmatprep.subr.mxu0 0.0
    %1650 = vmatpush1.msra.mxu0 0.0
    %1651 = vmatprep.subr.mxu0 0.0
    %1652 = vmatpush1.msra.mxu0 0.0
    %1653 = vmatprep.subr.mxu0 0.0
    %1654 = vmatpush1.msra.mxu0 0.0
    %1655 = vmatprep.subr.mxu0 0.0
    %1656 = vmatpush1.msra.mxu0 0.0
    %1657 = vmatprep.subr.mxu0 0.0
    %1658 = vmatpush1.msra.mxu0 0.0
    %1659 = vmatprep.subr.mxu0 0.0
    %1660 = vmatpush1.msra.mxu0 0.0
    %1661 = vmatprep.subr.mxu0 0.0
    %1662 = vmatpush1.msra.mxu0 0.0
    %1663 = vmatprep.subr.mxu0 0.0
    %1664 = vmatpush1.msra.mxu0 0.0
    %1665 = vmatprep.subr.mxu0 0.0
    %1666 = vmatpush1.msra.mxu0 0.0
    %1667 = vmatprep.subr.mxu0 0.0
    %1668 = vmatpush1.msra.mxu0 0.0
    %1669 = vmatprep.subr.mxu0 0.0
    %1670 = vmatpush1.msra.mxu0 0.0
    %1671 = vmatprep.mubr.f32.mxu0 0.0
    %1672 = vmatmul.mubr.f32.gmra.mrb[0].mxu0 %v1605
    %v1673 = vpop.f32.mrb[0].mxu0
    %v1674 = vadd.f32 0.0, %v1673
    %v1675 = vpop.f32.mrb[0].mxu0
    %v1676 = vadd.f32 0.0, %v1675
    %1677 = vdwg.mxu0
    %v1678 = vadd.f32 %v1584, %v1674
    %v1679 = vadd.f32 %v1585, %v1676
    %v1680 = vmul.f32 %v1137, %v654
    %v1681 = vmul.f32 %v1138, %v657
    %v1682 = vmul.f32 %v1139, %v656
    %s1683 = scalar_lea.vmem %s7, 48
    %v1684 = vld [vmem:[%s1683] sm:$0xff]
    %1688 = vrot.lane.b32.xlu0 %v1680, 113
    %v1689 = vpop.permute.xlu0 %1688
    %1690 = vrot.lane.b32.xlu0 %v1681, 113
    %v1691 = vpop.permute.xlu0 %1690
    %1692 = vrot.lane.b32.xlu0 %v1682, 113
    %v1693 = vpop.permute.xlu0 %1692
    %v1694 = vsel %vm269, %v1689, %v1691
    %v1695 = vsel %vm269, %v1691, %v1693
    %v1699 = vsel %vm93, %v1684, 0
    %1701 = vmatprep.subr.mxu0 %v1695
    %1702 = vmatpush1.msra.mxu0 %v1694
    %1703 = vmatprep.subr.mxu0 0.0
    %1704 = vmatpush1.msra.mxu0 0.0
    %1705 = vmatprep.subr.mxu0 0.0
    %1706 = vmatpush1.msra.mxu0 0.0
    %1707 = vmatprep.subr.mxu0 0.0
    %1708 = vmatpush1.msra.mxu0 0.0
    %1709 = vmatprep.subr.mxu0 0.0
    %1710 = vmatpush1.msra.mxu0 0.0
    %1711 = vmatprep.subr.mxu0 0.0
    %1712 = vmatpush1.msra.mxu0 0.0
    %1713 = vmatprep.subr.mxu0 0.0
    %1714 = vmatpush1.msra.mxu0 0.0
    %1715 = vmatprep.subr.mxu0 0.0
    %1716 = vmatpush1.msra.mxu0 0.0
    %1717 = vmatprep.subr.mxu0 0.0
    %1718 = vmatpush1.msra.mxu0 0.0
    %1719 = vmatprep.subr.mxu0 0.0
    %1720 = vmatpush1.msra.mxu0 0.0
    %1721 = vmatprep.subr.mxu0 0.0
    %1722 = vmatpush1.msra.mxu0 0.0
    %1723 = vmatprep.subr.mxu0 0.0
    %1724 = vmatpush1.msra.mxu0 0.0
    %1725 = vmatprep.subr.mxu0 0.0
    %1726 = vmatpush1.msra.mxu0 0.0
    %1727 = vmatprep.subr.mxu0 0.0
    %1728 = vmatpush1.msra.mxu0 0.0
    %1729 = vmatprep.subr.mxu0 0.0
    %1730 = vmatpush1.msra.mxu0 0.0
    %1731 = vmatprep.subr.mxu0 0.0
    %1732 = vmatpush1.msra.mxu0 0.0
    %1733 = vmatprep.subr.mxu0 0.0
    %1734 = vmatpush1.msra.mxu0 0.0
    %1735 = vmatprep.subr.mxu0 0.0
    %1736 = vmatpush1.msra.mxu0 0.0
    %1737 = vmatprep.subr.mxu0 0.0
    %1738 = vmatpush1.msra.mxu0 0.0
    %1739 = vmatprep.subr.mxu0 0.0
    %1740 = vmatpush1.msra.mxu0 0.0
    %1741 = vmatprep.subr.mxu0 0.0
    %1742 = vmatpush1.msra.mxu0 0.0
    %1743 = vmatprep.subr.mxu0 0.0
    %1744 = vmatpush1.msra.mxu0 0.0
    %1745 = vmatprep.subr.mxu0 0.0
    %1746 = vmatpush1.msra.mxu0 0.0
    %1747 = vmatprep.subr.mxu0 0.0
    %1748 = vmatpush1.msra.mxu0 0.0
    %1749 = vmatprep.subr.mxu0 0.0
    %1750 = vmatpush1.msra.mxu0 0.0
    %1751 = vmatprep.subr.mxu0 0.0
    %1752 = vmatpush1.msra.mxu0 0.0
    %1753 = vmatprep.subr.mxu0 0.0
    %1754 = vmatpush1.msra.mxu0 0.0
    %1755 = vmatprep.subr.mxu0 0.0
    %1756 = vmatpush1.msra.mxu0 0.0
    %1757 = vmatprep.subr.mxu0 0.0
    %1758 = vmatpush1.msra.mxu0 0.0
    %1759 = vmatprep.subr.mxu0 0.0
    %1760 = vmatpush1.msra.mxu0 0.0
    %1761 = vmatprep.subr.mxu0 0.0
    %1762 = vmatpush1.msra.mxu0 0.0
    %1763 = vmatprep.subr.mxu0 0.0
    %1764 = vmatpush1.msra.mxu0 0.0
    %1765 = vmatprep.mubr.f32.mxu0 0.0
    %1766 = vmatmul.mubr.f32.gmra.mrb[0].mxu0 %v1699
    %v1767 = vpop.f32.mrb[0].mxu0
    %v1768 = vadd.f32 0.0, %v1767
    %v1769 = vpop.f32.mrb[0].mxu0
    %v1770 = vadd.f32 0.0, %v1769
    %1771 = vdwg.mxu0
    %v1772 = vadd.f32 %v1678, %v1768
    %v1773 = vadd.f32 %v1679, %v1770
    %s1774 = scalar_lea.vmem %s7, 56
    %v1775 = vld [vmem:[%s1774] sm:$0xff]
    %1777 = vrot.lane.b32.xlu0 %v1137, 112
    %v1778 = vpop.permute.xlu0 %1777
    %1779 = vrot.lane.b32.xlu0 %v1138, 112
    %v1780 = vpop.permute.xlu0 %1779
    %1781 = vrot.lane.b32.xlu0 %v1139, 112
    %v1782 = vpop.permute.xlu0 %1781
    %v1783 = vsel %vm764, %v1778, %v1780
    %v1784 = vsel %vm764, %v1780, %v1782
    %v1788 = vsel %vm93, %v1775, 0
    %1790 = vmatprep.subr.mxu0 %v1784
    %1791 = vmatpush1.msra.mxu0 %v1783
    %1792 = vmatprep.subr.mxu0 0.0
    %1793 = vmatpush1.msra.mxu0 0.0
    %1794 = vmatprep.subr.mxu0 0.0
    %1795 = vmatpush1.msra.mxu0 0.0
    %1796 = vmatprep.subr.mxu0 0.0
    %1797 = vmatpush1.msra.mxu0 0.0
    %1798 = vmatprep.subr.mxu0 0.0
    %1799 = vmatpush1.msra.mxu0 0.0
    %1800 = vmatprep.subr.mxu0 0.0
    %1801 = vmatpush1.msra.mxu0 0.0
    %1802 = vmatprep.subr.mxu0 0.0
    %1803 = vmatpush1.msra.mxu0 0.0
    %1804 = vmatprep.subr.mxu0 0.0
    %1805 = vmatpush1.msra.mxu0 0.0
    %1806 = vmatprep.subr.mxu0 0.0
    %1807 = vmatpush1.msra.mxu0 0.0
    %1808 = vmatprep.subr.mxu0 0.0
    %1809 = vmatpush1.msra.mxu0 0.0
    %1810 = vmatprep.subr.mxu0 0.0
    %1811 = vmatpush1.msra.mxu0 0.0
    %1812 = vmatprep.subr.mxu0 0.0
    %1813 = vmatpush1.msra.mxu0 0.0
    %1814 = vmatprep.subr.mxu0 0.0
    %1815 = vmatpush1.msra.mxu0 0.0
    %1816 = vmatprep.subr.mxu0 0.0
    %1817 = vmatpush1.msra.mxu0 0.0
    %1818 = vmatprep.subr.mxu0 0.0
    %1819 = vmatpush1.msra.mxu0 0.0
    %1820 = vmatprep.subr.mxu0 0.0
    %1821 = vmatpush1.msra.mxu0 0.0
    %1822 = vmatprep.subr.mxu0 0.0
    %1823 = vmatpush1.msra.mxu0 0.0
    %1824 = vmatprep.subr.mxu0 0.0
    %1825 = vmatpush1.msra.mxu0 0.0
    %1826 = vmatprep.subr.mxu0 0.0
    %1827 = vmatpush1.msra.mxu0 0.0
    %1828 = vmatprep.subr.mxu0 0.0
    %1829 = vmatpush1.msra.mxu0 0.0
    %1830 = vmatprep.subr.mxu0 0.0
    %1831 = vmatpush1.msra.mxu0 0.0
    %1832 = vmatprep.subr.mxu0 0.0
    %1833 = vmatpush1.msra.mxu0 0.0
    %1834 = vmatprep.subr.mxu0 0.0
    %1835 = vmatpush1.msra.mxu0 0.0
    %1836 = vmatprep.subr.mxu0 0.0
    %1837 = vmatpush1.msra.mxu0 0.0
    %1838 = vmatprep.subr.mxu0 0.0
    %1839 = vmatpush1.msra.mxu0 0.0
    %1840 = vmatprep.subr.mxu0 0.0
    %1841 = vmatpush1.msra.mxu0 0.0
    %1842 = vmatprep.subr.mxu0 0.0
    %1843 = vmatpush1.msra.mxu0 0.0
    %1844 = vmatprep.subr.mxu0 0.0
    %1845 = vmatpush1.msra.mxu0 0.0
    %1846 = vmatprep.subr.mxu0 0.0
    %1847 = vmatpush1.msra.mxu0 0.0
    %1848 = vmatprep.subr.mxu0 0.0
    %1849 = vmatpush1.msra.mxu0 0.0
    %1850 = vmatprep.subr.mxu0 0.0
    %1851 = vmatpush1.msra.mxu0 0.0
    %1852 = vmatprep.subr.mxu0 0.0
    %1853 = vmatpush1.msra.mxu0 0.0
    %1854 = vmatprep.mubr.f32.mxu0 0.0
    %1855 = vmatmul.mubr.f32.gmra.mrb[0].mxu0 %v1788
    %v1856 = vpop.f32.mrb[0].mxu0
    %v1857 = vadd.f32 0.0, %v1856
    %v1858 = vpop.f32.mrb[0].mxu0
    %v1859 = vadd.f32 0.0, %v1858
    %1860 = vdwg.mxu0
    %v1861 = vadd.f32 %v1772, %v1857
    %v1862 = vadd.f32 %v1773, %v1859
    %v1863 = vmul.f32 %v1137, %v846
    %v1864 = vmul.f32 %v1138, %v849
    %v1865 = vmul.f32 %v1139, %v848
    %s1866 = scalar_lea.vmem %s7, 64
    %v1867 = vld [vmem:[%s1866] sm:$0xff]
    %1871 = vrot.lane.b32.xlu0 %v1863, 111
    %v1872 = vpop.permute.xlu0 %1871
    %1873 = vrot.lane.b32.xlu0 %v1864, 111
    %v1874 = vpop.permute.xlu0 %1873
    %1875 = vrot.lane.b32.xlu0 %v1865, 111
    %v1876 = vpop.permute.xlu0 %1875
    %v1877 = vsel %vm68, %v1872, %v1874
    %v1878 = vsel %vm68, %v1874, %v1876
    %v1882 = vsel %vm93, %v1867, 0
    %1884 = vmatprep.subr.mxu0 %v1878
    %1885 = vmatpush1.msra.mxu0 %v1877
    %1886 = vmatprep.subr.mxu0 0.0
    %1887 = vmatpush1.msra.mxu0 0.0
    %1888 = vmatprep.subr.mxu0 0.0
    %1889 = vmatpush1.msra.mxu0 0.0
    %1890 = vmatprep.subr.mxu0 0.0
    %1891 = vmatpush1.msra.mxu0 0.0
    %1892 = vmatprep.subr.mxu0 0.0
    %1893 = vmatpush1.msra.mxu0 0.0
    %1894 = vmatprep.subr.mxu0 0.0
    %1895 = vmatpush1.msra.mxu0 0.0
    %1896 = vmatprep.subr.mxu0 0.0
    %1897 = vmatpush1.msra.mxu0 0.0
    %1898 = vmatprep.subr.mxu0 0.0
    %1899 = vmatpush1.msra.mxu0 0.0
    %1900 = vmatprep.subr.mxu0 0.0
    %1901 = vmatpush1.msra.mxu0 0.0
    %1902 = vmatprep.subr.mxu0 0.0
    %1903 = vmatpush1.msra.mxu0 0.0
    %1904 = vmatprep.subr.mxu0 0.0
    %1905 = vmatpush1.msra.mxu0 0.0
    %1906 = vmatprep.subr.mxu0 0.0
    %1907 = vmatpush1.msra.mxu0 0.0
    %1908 = vmatprep.subr.mxu0 0.0
    %1909 = vmatpush1.msra.mxu0 0.0
    %1910 = vmatprep.subr.mxu0 0.0
    %1911 = vmatpush1.msra.mxu0 0.0
    %1912 = vmatprep.subr.mxu0 0.0
    %1913 = vmatpush1.msra.mxu0 0.0
    %1914 = vmatprep.subr.mxu0 0.0
    %1915 = vmatpush1.msra.mxu0 0.0
    %1916 = vmatprep.subr.mxu0 0.0
    %1917 = vmatpush1.msra.mxu0 0.0
    %1918 = vmatprep.subr.mxu0 0.0
    %1919 = vmatpush1.msra.mxu0 0.0
    %1920 = vmatprep.subr.mxu0 0.0
    %1921 = vmatpush1.msra.mxu0 0.0
    %1922 = vmatprep.subr.mxu0 0.0
    %1923 = vmatpush1.msra.mxu0 0.0
    %1924 = vmatprep.subr.mxu0 0.0
    %1925 = vmatpush1.msra.mxu0 0.0
    %1926 = vmatprep.subr.mxu0 0.0
    %1927 = vmatpush1.msra.mxu0 0.0
    %1928 = vmatprep.subr.mxu0 0.0
    %1929 = vmatpush1.msra.mxu0 0.0
    %1930 = vmatprep.subr.mxu0 0.0
    %1931 = vmatpush1.msra.mxu0 0.0
    %1932 = vmatprep.subr.mxu0 0.0
    %1933 = vmatpush1.msra.mxu0 0.0
    %1934 = vmatprep.subr.mxu0 0.0
    %1935 = vmatpush1.msra.mxu0 0.0
    %1936 = vmatprep.subr.mxu0 0.0
    %1937 = vmatpush1.msra.mxu0 0.0
    %1938 = vmatprep.subr.mxu0 0.0
    %1939 = vmatpush1.msra.mxu0 0.0
    %1940 = vmatprep.subr.mxu0 0.0
    %1941 = vmatpush1.msra.mxu0 0.0
    %1942 = vmatprep.subr.mxu0 0.0
    %1943 = vmatpush1.msra.mxu0 0.0
    %1944 = vmatprep.subr.mxu0 0.0
    %1945 = vmatpush1.msra.mxu0 0.0
    %1946 = vmatprep.subr.mxu0 0.0
    %1947 = vmatpush1.msra.mxu0 0.0
    %1948 = vmatprep.mubr.f32.mxu0 0.0
    %1949 = vmatmul.mubr.f32.gmra.mrb[0].mxu0 %v1882
    %v1950 = vpop.f32.mrb[0].mxu0
    %v1951 = vadd.f32 0.0, %v1950
    %v1952 = vpop.f32.mrb[0].mxu0
    %v1953 = vadd.f32 0.0, %v1952
    %1954 = vdwg.mxu0
    %v1955 = vadd.f32 %v1861, %v1951
    %v1956 = vadd.f32 %v1862, %v1953
    %v1957 = vld [vmem:[%s8] sm:$0xff]
    %1959 = vset.pattern.permute.xlu0 0
    %1960 = vperm.xlu0 %1959, %v1957
    %v1961 = vpop.permute.xlu0 %1960
    %v1963 = vadd.f32 %v1955, %v1961
    %v1964 = vadd.f32 %v1956, %v1961
    %v1965 = vadd.f32 %v1963, %v1964
    %1966 = vadd.xlane.f32.xlu0 %v1965
    %v1967 = vpop.xlane.xlu0 %1966
    %1968 = vmatprep.subr.mxu0 0.0
    %1969 = vmatpush1.msra.mxu0 %v1967
    %1970 = vmatprep.subr.mxu0 0.0
    %1971 = vmatpush1.msra.mxu0 0.0
    %1972 = vmatprep.subr.mxu0 0.0
    %1973 = vmatpush1.msra.mxu0 0.0
    %1974 = vmatprep.subr.mxu0 0.0
    %1975 = vmatpush1.msra.mxu0 0.0
    %1976 = vmatprep.subr.mxu0 0.0
    %1977 = vmatpush1.msra.mxu0 0.0
    %1978 = vmatprep.subr.mxu0 0.0
    %1979 = vmatpush1.msra.mxu0 0.0
    %1980 = vmatprep.subr.mxu0 0.0
    %1981 = vmatpush1.msra.mxu0 0.0
    %1982 = vmatprep.subr.mxu0 0.0
    %1983 = vmatpush1.msra.mxu0 0.0
    %1984 = vmatprep.subr.mxu0 0.0
    %1985 = vmatpush1.msra.mxu0 0.0
    %1986 = vmatprep.subr.mxu0 0.0
    %1987 = vmatpush1.msra.mxu0 0.0
    %1988 = vmatprep.subr.mxu0 0.0
    %1989 = vmatpush1.msra.mxu0 0.0
    %1990 = vmatprep.subr.mxu0 0.0
    %1991 = vmatpush1.msra.mxu0 0.0
    %1992 = vmatprep.subr.mxu0 0.0
    %1993 = vmatpush1.msra.mxu0 0.0
    %1994 = vmatprep.subr.mxu0 0.0
    %1995 = vmatpush1.msra.mxu0 0.0
    %1996 = vmatprep.subr.mxu0 0.0
    %1997 = vmatpush1.msra.mxu0 0.0
    %1998 = vmatprep.subr.mxu0 0.0
    %1999 = vmatpush1.msra.mxu0 0.0
    %2000 = vmatprep.subr.mxu0 0.0
    %2001 = vmatpush1.msra.mxu0 0.0
    %2002 = vmatprep.subr.mxu0 0.0
    %2003 = vmatpush1.msra.mxu0 0.0
    %2004 = vmatprep.subr.mxu0 0.0
    %2005 = vmatpush1.msra.mxu0 0.0
    %2006 = vmatprep.subr.mxu0 0.0
    %2007 = vmatpush1.msra.mxu0 0.0
    %2008 = vmatprep.subr.mxu0 0.0
    %2009 = vmatpush1.msra.mxu0 0.0
    %2010 = vmatprep.subr.mxu0 0.0
    %2011 = vmatpush1.msra.mxu0 0.0
    %2012 = vmatprep.subr.mxu0 0.0
    %2013 = vmatpush1.msra.mxu0 0.0
    %2014 = vmatprep.subr.mxu0 0.0
    %2015 = vmatpush1.msra.mxu0 0.0
    %2016 = vmatprep.subr.mxu0 0.0
    %2017 = vmatpush1.msra.mxu0 0.0
    %2018 = vmatprep.subr.mxu0 0.0
    %2019 = vmatpush1.msra.mxu0 0.0
    %2020 = vmatprep.subr.mxu0 0.0
    %2021 = vmatpush1.msra.mxu0 0.0
    %2022 = vmatprep.subr.mxu0 0.0
    %2023 = vmatpush1.msra.mxu0 0.0
    %2024 = vmatprep.subr.mxu0 0.0
    %2025 = vmatpush1.msra.mxu0 0.0
    %2026 = vmatprep.subr.mxu0 0.0
    %2027 = vmatpush1.msra.mxu0 0.0
    %2028 = vmatprep.subr.mxu0 0.0
    %2029 = vmatpush1.msra.mxu0 0.0
    %2030 = vmatprep.subr.mxu0 0.0
    %2031 = vmatpush1.msra.mxu0 0.0
    %2032 = vmatprep.mubr.f32.mxu0 0.0
    %2033 = vmatmul.mubr.f32.gmra.mrb[0].mxu0 %v959
    %v2034 = vpop.f32.mrb[0].mxu0
    %v2035 = vadd.f32 0.0, %v2034
    %v2036 = vpop.f32.mrb[0].mxu0
    %2037 = vdwg.mxu0
    %v2038 = vmul.f32 %v1963, %v1963
    %v2039 = vmul.f32 %v1964, %v1964
    %v2040 = vadd.f32 %v2038, %v2039
    %2041 = vadd.xlane.f32.xlu0 %v2040
    %v2042 = vpop.xlane.xlu0 %2041
    %2043 = vmatprep.subr.mxu0 0.0
    %2044 = vmatpush1.msra.mxu0 %v2042
    %2045 = vmatprep.subr.mxu0 0.0
    %2046 = vmatpush1.msra.mxu0 0.0
    %2047 = vmatprep.subr.mxu0 0.0
    %2048 = vmatpush1.msra.mxu0 0.0
    %2049 = vmatprep.subr.mxu0 0.0
    %2050 = vmatpush1.msra.mxu0 0.0
    %2051 = vmatprep.subr.mxu0 0.0
    %2052 = vmatpush1.msra.mxu0 0.0
    %2053 = vmatprep.subr.mxu0 0.0
    %2054 = vmatpush1.msra.mxu0 0.0
    %2055 = vmatprep.subr.mxu0 0.0
    %2056 = vmatpush1.msra.mxu0 0.0
    %2057 = vmatprep.subr.mxu0 0.0
    %2058 = vmatpush1.msra.mxu0 0.0
    %2059 = vmatprep.subr.mxu0 0.0
    %2060 = vmatpush1.msra.mxu0 0.0
    %2061 = vmatprep.subr.mxu0 0.0
    %2062 = vmatpush1.msra.mxu0 0.0
    %2063 = vmatprep.subr.mxu0 0.0
    %2064 = vmatpush1.msra.mxu0 0.0
    %2065 = vmatprep.subr.mxu0 0.0
    %2066 = vmatpush1.msra.mxu0 0.0
    %2067 = vmatprep.subr.mxu0 0.0
    %2068 = vmatpush1.msra.mxu0 0.0
    %2069 = vmatprep.subr.mxu0 0.0
    %2070 = vmatpush1.msra.mxu0 0.0
    %2071 = vmatprep.subr.mxu0 0.0
    %2072 = vmatpush1.msra.mxu0 0.0
    %2073 = vmatprep.subr.mxu0 0.0
    %2074 = vmatpush1.msra.mxu0 0.0
    %2075 = vmatprep.subr.mxu0 0.0
    %2076 = vmatpush1.msra.mxu0 0.0
    %2077 = vmatprep.subr.mxu0 0.0
    %2078 = vmatpush1.msra.mxu0 0.0
    %2079 = vmatprep.subr.mxu0 0.0
    %2080 = vmatpush1.msra.mxu0 0.0
    %2081 = vmatprep.subr.mxu0 0.0
    %2082 = vmatpush1.msra.mxu0 0.0
    %2083 = vmatprep.subr.mxu0 0.0
    %2084 = vmatpush1.msra.mxu0 0.0
    %2085 = vmatprep.subr.mxu0 0.0
    %2086 = vmatpush1.msra.mxu0 0.0
    %2087 = vmatprep.subr.mxu0 0.0
    %2088 = vmatpush1.msra.mxu0 0.0
    %2089 = vmatprep.subr.mxu0 0.0
    %2090 = vmatpush1.msra.mxu0 0.0
    %2091 = vmatprep.subr.mxu0 0.0
    %2092 = vmatpush1.msra.mxu0 0.0
    %2093 = vmatprep.subr.mxu0 0.0
    %2094 = vmatpush1.msra.mxu0 0.0
    %2095 = vmatprep.subr.mxu0 0.0
    %2096 = vmatpush1.msra.mxu0 0.0
    %2097 = vmatprep.subr.mxu0 0.0
    %2098 = vmatpush1.msra.mxu0 0.0
    %2099 = vmatprep.subr.mxu0 0.0
    %2100 = vmatpush1.msra.mxu0 0.0
    %2101 = vmatprep.subr.mxu0 0.0
    %2102 = vmatpush1.msra.mxu0 0.0
    %2103 = vmatprep.subr.mxu0 0.0
    %2104 = vmatpush1.msra.mxu0 0.0
    %2105 = vmatprep.subr.mxu0 0.0
    %2106 = vmatpush1.msra.mxu0 0.0
    %2107 = vmatprep.mubr.f32.mxu0 0.0
    %2108 = vmatmul.mubr.f32.gmra.mrb[0].mxu0 %v959
    %v2109 = vpop.f32.mrb[0].mxu0
    %v2110 = vadd.f32 0.0, %v2109
    %v2111 = vpop.f32.mrb[0].mxu0
    %2112 = vdwg.mxu0
    %v2113 = vmul.f32 %v2035, 0.001953125
    %v2114 = vmul.f32 %v2110, 0.001953125
    %v2115 = vmul.f32 %v2113, %v2113
    %v2116 = vsub.f32 %v2114, %v2115
    %v2117 = vmax.f32 %v2116, 0.0
    %v2118 = vld [vmem:[%s9] sm:$0xff]
    %v2119 = vadd.f32 %v2117, 1e-05
    %v2120 = vrsqrt.pop %v2119
    %v2121 = vmul.f32 %v2118, %v2120
    %v2122 = vld [vmem:[%s10] sm:$0xff]
    %v2123 = vmul.f32 %v2113, %v2121
    %v2124 = vsub.f32 %v2122, %v2123
    %2126 = vset.pattern.permute.xlu0 0
    %2127 = vperm.xlu0 %2126, %v2121
    %v2128 = vpop.permute.xlu0 %2127
    %v2130 = vmul.f32 %v1963, %v2128
    %v2131 = vmul.f32 %v1964, %v2128
    %2133 = vset.pattern.permute.xlu0 0
    %2134 = vperm.xlu0 %2133, %v2124
    %v2135 = vpop.permute.xlu0 %2134
    %v2137 = vadd.f32 %v2130, %v2135
    %v2138 = vadd.f32 %v2131, %v2135
    %v2139 = vadd.f32 %v2137, %v47
    %v2140 = vadd.f32 %v2138, %v48
    %v2141 = vmax.f32 %v2139, 0.0
    %v2142 = vmax.f32 %v2140, 0.0
    %2143 = vst [vmem:[#allocation3] sm:$0xff] %v2141
    %2144 = vst [vmem:[#allocation3 + $0x8] sm:$0xff] %v2142
    // Predicated region
    $region46: #{tpu_custom_call.1} parent=1 // pred_check
      _
    $region47: #{tpu_custom_call.1} parent=1 // pred_check_branch
      %2146 = sbr.rel (0) target = $region49
    $region48: #{tpu_custom_call.1} parent=1 // pred_region
      %s2148 = ssub.s32 256, 256
      %2149 = vsyncadd [#allocation4], %s2148
      %s2151 = sshll.u32 [#allocation3], 4
      %s2152 = int_to_ptr.vmem [resolvable:$true] %s2151
      %2154 = dma.vmem_to_hbm [thread:$0]  %s2152, 256, %s11, [#allocation4]
    $region49: #{tpu_custom_call.1} parent=1 // pred_fallthru
      _
    // Predicated region
    $region50: #{tpu_custom_call.1} parent=1 // pred_check
      _
    $region51: #{tpu_custom_call.1} parent=1 // pred_check_branch
      %2156 = sbr.rel (0) target = $region53
    $region52: #{tpu_custom_call.1} parent=1 // pred_region
      %2157 = dma.done [#allocation4], 256
    $region53: #{tpu_custom_call.1} parent=1 // pred_fallthru
      _
    %2158 = vsyncpa [#allocation4], 1

</llo_original>
